<compile_context>
chip_gen: v5e
topology: v5e:2x2
jax: 0.10.0
libtpu: 0.0.40
codegen_flags: <defaults>
</compile_context>

<pallas_src>
import functools

import jax
import jax.numpy as jnp
import numpy as np
from jax.experimental import pallas as pl
from jax.experimental.pallas import tpu as pltpu

_LANE = 128
_SMALL_K = 8  # contractions at/below this width skip the MXU (exact f32 VPU FMAs)


def _round_up(x, m):
    return (x + m - 1) // m * m


def _matmul_t(w, h):
    """w: (Dout, K) f32, h: (K, TN) f32 -> (Dout, TN) f32 (transposed layout)."""
    k = w.shape[1]
    if k <= _SMALL_K:
        # Tiny contraction (e.g. the 3-wide coordinate / skip part): an MXU
        # matmul would use a sliver of the systolic array and pay push/pop
        # latency; do K broadcast-FMAs on the VPU instead.  Exact f32.
        acc = w[:, 0:1] * h[0:1, :]
        for j in range(1, k):
            acc = acc + w[:, j:j + 1] * h[j:j + 1, :]
        return acc
    # f32 MXU matmul at full precision (SIREN is sensitive to pre-activation
    # error since w0=30 is folded into w).
    return jnp.dot(w, h, preferred_element_type=jnp.float32,
                   precision=jax.lax.Precision.HIGHEST)


def _slc(P, piece):
    """Static slice of the packed parameter block. piece = (rows, col0, col1)."""
    r, c0, c1 = piece
    return P[:r, c0:c1]


# ----------------------------------------------------------------------------
# Fused Pallas kernel: whole SirenNet forward on one (dim_in, TN) column tile.
# ----------------------------------------------------------------------------
def _siren_fused_kernel(x_ref, params_ref, o_ref, *, layer_meta, last_w, last_b):
    P = params_ref[...]                         # packed, w0-folded weights/biases
    x0 = x_ref[...]                             # (dim_in, TN) original coordinates
    h = x0
    for entry in layer_meta:                    # statically unrolled layer loop
        if entry[0]:                            # skip layer: concat folded into 2 dots
            _, wh_p, ws_p, b_p = entry
            y = _matmul_t(_slc(P, wh_p), h) + _matmul_t(_slc(P, ws_p), x0)
        else:
            _, w_p, b_p = entry
            y = _matmul_t(_slc(P, w_p), h)
        # w0 already folded into the weights/bias -> plain sin(y + b').
        h = jnp.sin(y + _slc(P, b_p))
    out = _matmul_t(_slc(P, last_w), h) + _slc(P, last_b)   # Identity activation
    o_ref[...] = out.astype(o_ref.dtype)        # (dim_out, TN), lane-dense store


# ----------------------------------------------------------------------------
# Wrapper: packs/folds parameters, builds the transposed grid & BlockSpecs.
# ----------------------------------------------------------------------------
def siren_net_forward(x, layers, last, skip_flags, *, tile_points=2048):
    """x: (N, dim_in) f32 -> (N, dim_out) f32, matching SirenNet.forward."""
    n, dim_in = x.shape
    Wl, bl = last
    dim_out = Wl.shape[0]
    dim_hidden = layers[0][0].shape[0]
    rows_max = max(dim_hidden, dim_out)

    # ---- pack all (w0-folded) weights & biases into one VMEM-resident operand
    pieces = []
    col = 0

    def add(a):
        nonlocal col
        a = jnp.asarray(a, jnp.float32)
        r, c = a.shape
        if r < rows_max:
            a = jnp.pad(a, ((0, rows_max - r), (0, 0)))
        pieces.append(a)
        desc = (r, col, col + c)
        col += c
        return desc

    layer_meta = []
    for k, (W, b, w0) in enumerate(layers):
        Wf = jnp.asarray(W, jnp.float32) * float(w0)   # fold Sine's w0 into W
        bf = jnp.asarray(b, jnp.float32) * float(w0)   # ... and into b
        dout = Wf.shape[0]
        if skip_flags[k]:
            din_h = Wf.shape[1] - dim_in               # columns acting on hidden part
            wh = add(Wf[:, :din_h])                    # (dout, din_h)
            ws = add(Wf[:, din_h:])                    # (dout, dim_in) skip part
            bd = add(bf.reshape(dout, 1))
            layer_meta.append((True, wh, ws, bd))
        else:
            wd = add(Wf)                               # (dout, din)
            bd = add(bf.reshape(dout, 1))
            layer_meta.append((False, wd, bd))
    last_w = add(jnp.asarray(Wl, jnp.float32))         # (dim_out, dim_hidden), no w0 fold
    last_b = add(jnp.asarray(bl, jnp.float32).reshape(dim_out, 1))
    params = jnp.concatenate(pieces, axis=1)           # (rows_max, total_cols)

    # ---- batch (lane) tiling: pad N up to a multiple of the lane-aligned tile
    tn_req = max(_LANE, _round_up(int(tile_points), _LANE))
    n_pad_min = _round_up(n, _LANE)
    tn = min(tn_req, n_pad_min)
    # v7x megacore: make sure there are >= 2 batch tiles to shard across 2 TCs.
    if n_pad_min // tn < 2 and n_pad_min >= 2 * _LANE:
        tn = _round_up((n_pad_min + 1) // 2, _LANE)
    n_pad = _round_up(n, tn)

    # Transposed ("batch-on-lanes") input: (dim_in, N) -> pad lanes to n_pad.
    xt = jnp.asarray(x, jnp.float32).T
    if n_pad != n:
        xt = jnp.pad(xt, ((0, 0), (0, n_pad - n)))

    grid = (n_pad // tn,)
    kernel = functools.partial(_siren_fused_kernel,
                               layer_meta=tuple(layer_meta),
                               last_w=last_w, last_b=last_b)
    out_t = pl.pallas_call(
        kernel,
        out_shape=jax.ShapeDtypeStruct((dim_out, n_pad), jnp.float32),
        grid=grid,
        in_specs=[
            pl.BlockSpec((dim_in, tn), lambda i: (0, i)),      # streamed coord tile
            pl.BlockSpec(params.shape, lambda i: (0, 0)),      # resident packed params
        ],
        out_specs=pl.BlockSpec((dim_out, tn), lambda i: (0, i)),
        compiler_params=pltpu.CompilerParams(
            dimension_semantics=("parallel",)),                # shard tiles across TCs
    )(xt, params)
    return out_t[:, :n].T                                      # back to (N, dim_out)


# ----------------------------------------------------------------------------
# Parameter init (deterministic, mirrors SirenLayer.init_)
# ----------------------------------------------------------------------------
def init_siren_params(key, dim_in, dim_hidden, dim_out, num_layers, skip,
                      w0=30.0, w0_initial=30.0, c=6.0):
    skip_flags = [i in skip for i in range(num_layers)]
    layers = []
    for ind in range(num_layers):
        is_first = ind == 0
        layer_w0 = w0_initial if is_first else w0
        layer_dim_in = (dim_in if is_first else dim_hidden) + (3 if skip_flags[ind] else 0)
        w_std = (1.0 / layer_dim_in) if is_first else (np.sqrt(c / layer_dim_in) / layer_w0)
        key, kw, kb = jax.random.split(key, 3)
        W = jax.random.uniform(kw, (dim_hidden, layer_dim_in),
                               minval=-w_std, maxval=w_std, dtype=jnp.float32)
        bv = jax.random.uniform(kb, (dim_hidden,),
                                minval=-w_std, maxval=w_std, dtype=jnp.float32)
        layers.append((W, bv, layer_w0))

    # last layer: dim_hidden -> dim_out, Identity activation, w0 used only for init
    w_std = np.sqrt(c / dim_hidden) / w0
    key, kw, kb = jax.random.split(key, 3)
    Wl = jax.random.uniform(kw, (dim_out, dim_hidden),
                            minval=-w_std, maxval=w_std, dtype=jnp.float32)
    bl = jax.random.uniform(kb, (dim_out,),
                            minval=-w_std, maxval=w_std, dtype=jnp.float32)
    return layers, (Wl, bl), skip_flags


# ----------------------------------------------------------------------------
# Pure-JAX reference (matches SirenNet.forward) for the sanity check
# ----------------------------------------------------------------------------
def siren_net_ref(x, layers, last, skip_flags):
    i = x
    for k, (W, b, layer_w0) in enumerate(layers):
        inp = x if not skip_flags[k] else jnp.concatenate((x, i), axis=-1)
        x = jnp.sin(layer_w0 * (inp @ W.T + b))
    Wl, bl = last
    return x @ Wl.T + bl


if __name__ == "__main__":
    # Config consistent with the module: 3-D coordinate input (the skip
    # concatenates the 3-D input), hidden 32, output 4, 3 hidden layers,
    # skip at layer 1.
    dim_in, dim_hidden, dim_out, num_layers = 3, 32, 4, 3
    skip = [1]

    key = jax.random.PRNGKey(0)
    key, kp = jax.random.split(key)
    layers, last, skip_flags = init_siren_params(
        kp, dim_in, dim_hidden, dim_out, num_layers, skip,
        w0=30.0, w0_initial=30.0, c=6.0)

    # --- tiny single-tile check (N < 128: heavy lane padding path) ---
    key, kx = jax.random.split(key)
    x_small = jax.random.normal(kx, (8, dim_in), dtype=jnp.float32)
    out_small = jax.block_until_ready(
        siren_net_forward(x_small, layers, last, skip_flags))
    ref_small = jax.block_until_ready(siren_net_ref(x_small, layers, last, skip_flags))
    assert out_small.shape == (8, dim_out), out_small.shape
    np.testing.assert_allclose(np.asarray(out_small), np.asarray(ref_small),
                               rtol=2e-3, atol=2e-4)

    # --- default tiles: exercises the >=2-tile (v7x megacore) split + padding ---
    key, kx2 = jax.random.split(key)
    x_mid = jax.random.normal(kx2, (200, dim_in), dtype=jnp.float32)
    out_mid = jax.block_until_ready(
        siren_net_forward(x_mid, layers, last, skip_flags))
    ref_mid = jax.block_until_ready(siren_net_ref(x_mid, layers, last, skip_flags))
    assert out_mid.shape == (200, dim_out), out_mid.shape
    np.testing.assert_allclose(np.asarray(out_mid), np.asarray(ref_mid),
                               rtol=2e-3, atol=2e-4)

    # --- multi-tile check with an explicit small tile (700 -> 3 x 256) ---
    key, kx3 = jax.random.split(key)
    x_big = jax.random.normal(kx3, (700, dim_in), dtype=jnp.float32)
    out_big = jax.block_until_ready(
        siren_net_forward(x_big, layers, last, skip_flags, tile_points=256))
    ref_big = jax.block_until_ready(siren_net_ref(x_big, layers, last, skip_flags))
    assert out_big.shape == (700, dim_out), out_big.shape
    np.testing.assert_allclose(np.asarray(out_big), np.asarray(ref_big),
                               rtol=2e-3, atol=2e-4)

    print("KERNEL_OK")
</pallas_src>

<mosaic_0001>
module attributes {stable_mosaic.version = 11 : i64} {
  func.func @_siren_fused_kernel(%arg0: i32, %arg1: memref<3x128xf32, #tpu.memory_space<vmem>>, %arg2: memref<32x106xf32, #tpu.memory_space<vmem>>, %arg3: memref<4x128xf32, #tpu.memory_space<vmem>>) attributes {dimension_semantics = [#tpu.dimension_semantics<parallel>], iteration_bounds = array<i64: 1>, scalar_prefetch = 0 : i64, scratch_operands = 0 : i64, tpu.core_type = #tpu.core_type<tc>, window_params = [{transform_indices = @transform_0, window_bounds = array<i64: 3, 128>}, {pipeline_mode = #tpu.pipeline_mode<synchronous>, transform_indices = @transform_1, window_bounds = array<i64: 32, 106>}, {transform_indices = @transform_2, window_bounds = array<i64: 4, 128>}]} {
    %c0 = arith.constant 0 : index
    %c0_0 = arith.constant 0 : index
    %0 = vector.load %arg2[%c0, %c0_0] : memref<32x106xf32, #tpu.memory_space<vmem>>, vector<32x106xf32>
    %c0_1 = arith.constant 0 : index
    %c0_2 = arith.constant 0 : index
    %1 = vector.load %arg1[%c0_1, %c0_2] : memref<3x128xf32, #tpu.memory_space<vmem>>, vector<3x128xf32>
    %2 = vector.extract_strided_slice %0 {offsets = [0, 0], sizes = [32, 3], strides = [1, 1]} : vector<32x106xf32> to vector<32x3xf32>
    %3 = vector.extract_strided_slice %2 {offsets = [0, 0], sizes = [32, 1], strides = [1, 1]} : vector<32x3xf32> to vector<32x1xf32>
    %4 = vector.extract_strided_slice %1 {offsets = [0, 0], sizes = [1, 128], strides = [1, 1]} : vector<3x128xf32> to vector<1x128xf32>
    %5 = vector.broadcast %3 : vector<32x1xf32> to vector<32x128xf32>
    %6 = vector.broadcast %4 : vector<1x128xf32> to vector<32x128xf32>
    %7 = arith.mulf %5, %6 : vector<32x128xf32>
    %8 = vector.extract_strided_slice %2 {offsets = [0, 1], sizes = [32, 1], strides = [1, 1]} : vector<32x3xf32> to vector<32x1xf32>
    %9 = vector.extract_strided_slice %1 {offsets = [1, 0], sizes = [1, 128], strides = [1, 1]} : vector<3x128xf32> to vector<1x128xf32>
    %10 = vector.broadcast %8 : vector<32x1xf32> to vector<32x128xf32>
    %11 = vector.broadcast %9 : vector<1x128xf32> to vector<32x128xf32>
    %12 = arith.mulf %10, %11 : vector<32x128xf32>
    %13 = arith.addf %7, %12 : vector<32x128xf32>
    %14 = vector.extract_strided_slice %2 {offsets = [0, 2], sizes = [32, 1], strides = [1, 1]} : vector<32x3xf32> to vector<32x1xf32>
    %15 = vector.extract_strided_slice %1 {offsets = [2, 0], sizes = [1, 128], strides = [1, 1]} : vector<3x128xf32> to vector<1x128xf32>
    %16 = vector.broadcast %14 : vector<32x1xf32> to vector<32x128xf32>
    %17 = vector.broadcast %15 : vector<1x128xf32> to vector<32x128xf32>
    %18 = arith.mulf %16, %17 : vector<32x128xf32>
    %19 = arith.addf %13, %18 : vector<32x128xf32>
    %20 = vector.extract_strided_slice %0 {offsets = [0, 3], sizes = [32, 1], strides = [1, 1]} : vector<32x106xf32> to vector<32x1xf32>
    %21 = vector.broadcast %20 : vector<32x1xf32> to vector<32x128xf32>
    %22 = arith.addf %19, %21 : vector<32x128xf32>
    %23 = math.sin %22 : vector<32x128xf32>
    %24 = vector.extract_strided_slice %0 {offsets = [0, 4], sizes = [32, 32], strides = [1, 1]} : vector<32x106xf32> to vector<32x32xf32>
    %cst = arith.constant dense<0.000000e+00> : vector<32x128xf32>
    %25 = tpu.matmul %24, %23, %cst {dimension_numbers = #tpu.dot_dimension_numbers<[1], [0], [0], [1], [0, 0, 1, 1], [], []>, precision = #tpu.contract_precision<fp32>} : vector<32x32xf32>, vector<32x128xf32>, vector<32x128xf32> -> vector<32x128xf32>
    %26 = vector.extract_strided_slice %0 {offsets = [0, 36], sizes = [32, 3], strides = [1, 1]} : vector<32x106xf32> to vector<32x3xf32>
    %27 = vector.extract_strided_slice %26 {offsets = [0, 0], sizes = [32, 1], strides = [1, 1]} : vector<32x3xf32> to vector<32x1xf32>
    %28 = vector.extract_strided_slice %1 {offsets = [0, 0], sizes = [1, 128], strides = [1, 1]} : vector<3x128xf32> to vector<1x128xf32>
    %29 = vector.broadcast %27 : vector<32x1xf32> to vector<32x128xf32>
    %30 = vector.broadcast %28 : vector<1x128xf32> to vector<32x128xf32>
    %31 = arith.mulf %29, %30 : vector<32x128xf32>
    %32 = vector.extract_strided_slice %26 {offsets = [0, 1], sizes = [32, 1], strides = [1, 1]} : vector<32x3xf32> to vector<32x1xf32>
    %33 = vector.extract_strided_slice %1 {offsets = [1, 0], sizes = [1, 128], strides = [1, 1]} : vector<3x128xf32> to vector<1x128xf32>
    %34 = vector.broadcast %32 : vector<32x1xf32> to vector<32x128xf32>
    %35 = vector.broadcast %33 : vector<1x128xf32> to vector<32x128xf32>
    %36 = arith.mulf %34, %35 : vector<32x128xf32>
    %37 = arith.addf %31, %36 : vector<32x128xf32>
    %38 = vector.extract_strided_slice %26 {offsets = [0, 2], sizes = [32, 1], strides = [1, 1]} : vector<32x3xf32> to vector<32x1xf32>
    %39 = vector.extract_strided_slice %1 {offsets = [2, 0], sizes = [1, 128], strides = [1, 1]} : vector<3x128xf32> to vector<1x128xf32>
    %40 = vector.broadcast %38 : vector<32x1xf32> to vector<32x128xf32>
    %41 = vector.broadcast %39 : vector<1x128xf32> to vector<32x128xf32>
    %42 = arith.mulf %40, %41 : vector<32x128xf32>
    %43 = arith.addf %37, %42 : vector<32x128xf32>
    %44 = arith.addf %25, %43 : vector<32x128xf32>
    %45 = vector.extract_strided_slice %0 {offsets = [0, 39], sizes = [32, 1], strides = [1, 1]} : vector<32x106xf32> to vector<32x1xf32>
    %46 = vector.broadcast %45 : vector<32x1xf32> to vector<32x128xf32>
    %47 = arith.addf %44, %46 : vector<32x128xf32>
    %48 = math.sin %47 : vector<32x128xf32>
    %49 = vector.extract_strided_slice %0 {offsets = [0, 40], sizes = [32, 32], strides = [1, 1]} : vector<32x106xf32> to vector<32x32xf32>
    %cst_3 = arith.constant dense<0.000000e+00> : vector<32x128xf32>
    %50 = tpu.matmul %49, %48, %cst_3 {dimension_numbers = #tpu.dot_dimension_numbers<[1], [0], [0], [1], [0, 0, 1, 1], [], []>, precision = #tpu.contract_precision<fp32>} : vector<32x32xf32>, vector<32x128xf32>, vector<32x128xf32> -> vector<32x128xf32>
    %51 = vector.extract_strided_slice %0 {offsets = [0, 72], sizes = [32, 1], strides = [1, 1]} : vector<32x106xf32> to vector<32x1xf32>
    %52 = vector.broadcast %51 : vector<32x1xf32> to vector<32x128xf32>
    %53 = arith.addf %50, %52 : vector<32x128xf32>
    %54 = math.sin %53 : vector<32x128xf32>
    %55 = vector.extract_strided_slice %0 {offsets = [0, 73], sizes = [4, 32], strides = [1, 1]} : vector<32x106xf32> to vector<4x32xf32>
    %cst_4 = arith.constant dense<0.000000e+00> : vector<4x128xf32>
    %56 = tpu.matmul %55, %54, %cst_4 {dimension_numbers = #tpu.dot_dimension_numbers<[1], [0], [0], [1], [0, 0, 1, 1], [], []>, precision = #tpu.contract_precision<fp32>} : vector<4x32xf32>, vector<32x128xf32>, vector<4x128xf32> -> vector<4x128xf32>
    %57 = vector.extract_strided_slice %0 {offsets = [0, 105], sizes = [4, 1], strides = [1, 1]} : vector<32x106xf32> to vector<4x1xf32>
    %58 = vector.broadcast %57 : vector<4x1xf32> to vector<4x128xf32>
    %59 = arith.addf %56, %58 : vector<4x128xf32>
    %c0_5 = arith.constant 0 : index
    %c0_6 = arith.constant 0 : index
    %60 = vector.load %arg3[%c0_5, %c0_6] : memref<4x128xf32, #tpu.memory_space<vmem>>, vector<4x128xf32>
    tpu.vector_store %arg3[%c0_5, %c0_6], %59 {strides = array<i32>} : memref<4x128xf32, #tpu.memory_space<vmem>>, vector<4x128xf32>,
    return
  }
  func.func @transform_0(%arg0: i32) -> (i32, i32) {
    %c0_i32 = arith.constant 0 : i32
    %c0_i32_0 = arith.constant 0 : i32
    return %c0_i32, %arg0 : i32, i32
  }
  func.func @transform_1(%arg0: i32) -> (i32, i32) {
    %c0_i32 = arith.constant 0 : i32
    %c0_i32_0 = arith.constant 0 : i32
    %c0_i32_1 = arith.constant 0 : i32
    return %c0_i32, %c0_i32_0 : i32, i32
  }
  func.func @transform_2(%arg0: i32) -> (i32, i32) {
    %c0_i32 = arith.constant 0 : i32
    %c0_i32_0 = arith.constant 0 : i32
    return %c0_i32, %arg0 : i32, i32
  }
}

</mosaic_0001>

<llo_original>
// kernel: tpu_custom_call.1
$region0: #{tpu_custom_call.1}
  #allocation0 [shape = 'u32[]', space=smem, size = 0x4, offset = 0x4, fixed_abs, tag = 'smem constant byte address 0x4 - core index']
  #allocation1 [shape = 'u32[72,128]{1,0:T(1,128)}', space=vmem, size = 0x9000, scoped, tag = 'internal scratch']
  %s0 = inlined_call_operand.hbm [shape: f32[3,128], index: 0, kind: input, shape index: {}]
  %s1 = inlined_call_operand.hbm [shape: f32[32,106], index: 1, kind: input, shape index: {}]
  %s2 = inlined_call_operand.hbm [shape: f32[4,128], index: 2, kind: output, shape index: {}]
  %s3 = sld [smem:[#allocation0]]
  $region26: #{tpu_custom_call.1} parent=0
    _
  %s5 = ssub.s32 1, %s3
  %s6 = scalar_select 0, %s5, %s3
  $region1: #{tpu_custom_call.1} parent=0
    #allocation2 [shape = 'u8[2048]{0}', space=vmem, size = 0x800, scoped, tag = 'input window, operand 0, single buffered']
    #allocation3 [shape = 's32[1]{0}', space=sflag, size = 0x4, scoped, tag = 'scoped memory for tpu_custom_call.1']
    #allocation4 [shape = 's32[1]{0}', space=sflag, size = 0x4, scoped, tag = 'scoped memory for tpu_custom_call.1']
    #allocation5 [shape = 'u8[16384]{0}', space=vmem, size = 0x4000, scoped, tag = 'input window, operand 1, single buffered']
    #allocation6 [shape = 's32[1]{0}', space=sflag, size = 0x4, scoped, tag = 'scoped memory for tpu_custom_call.1']
    #allocation7 [shape = 'u8[2048]{0}', space=vmem, size = 0x800, scoped, tag = 'output window, operand 0, single buffered']
    %7 = vsyncpa [#allocation3], 0
    %8 = vsyncpa [#allocation6], 0
    %9 = vsyncpa [#allocation4], 0
    // Predicated region
    $region2: #{tpu_custom_call.1} parent=1 // pred_check
      _
    $region3: #{tpu_custom_call.1} parent=1 // pred_check_branch
      %11 = sbr.rel (0) target = $region5
    $region4: #{tpu_custom_call.1} parent=1 // pred_region
      %13 = vsyncadd [#allocation3], 0
      %s15 = sshll.u32 %s0, 4
      %s16 = int_to_ptr.hbm [resolvable:$true] %s15
      %s17 = sshll.u32 [#allocation2], 4
      %s18 = int_to_ptr.vmem [resolvable:$true] %s17
      %20 = dma.hbm_to_vmem [thread:$0]  %s16, 64, %s18, [#allocation3]
    $region5: #{tpu_custom_call.1} parent=1 // pred_fallthru
      _
    // Predicated region
    $region6: #{tpu_custom_call.1} parent=1 // pred_check
      _
    $region7: #{tpu_custom_call.1} parent=1 // pred_check_branch
      %22 = sbr.rel (0) target = $region9
    $region8: #{tpu_custom_call.1} parent=1 // pred_region
      %24 = vsyncadd [#allocation6], 0
      %s25 = sshll.u32 %s1, 4
      %s26 = int_to_ptr.hbm [resolvable:$true] %s25
      %s27 = sshll.u32 [#allocation5], 4
      %s28 = int_to_ptr.vmem [resolvable:$true] %s27
      %33 = dma.hbm_to_vmem [thread:$0]  %s26, 512, %s28, [#allocation6], 128, 128, 8
    $region9: #{tpu_custom_call.1} parent=1 // pred_fallthru
      _
    // Predicated region
    $region10: #{tpu_custom_call.1} parent=1 // pred_check
      _
    $region11: #{tpu_custom_call.1} parent=1 // pred_check_branch
      %35 = sbr.rel (0) target = $region13
    $region12: #{tpu_custom_call.1} parent=1 // pred_region
      %37 = dma.done [#allocation3], 64
    $region13: #{tpu_custom_call.1} parent=1 // pred_fallthru
      _
    // Predicated region
    $region14: #{tpu_custom_call.1} parent=1 // pred_check
      _
    $region15: #{tpu_custom_call.1} parent=1 // pred_check_branch
      %39 = sbr.rel (0) target = $region17
    $region16: #{tpu_custom_call.1} parent=1 // pred_region
      %41 = dma.done [#allocation6], 512
    $region17: #{tpu_custom_call.1} parent=1 // pred_fallthru
      _
    %v42 = vld [vmem:[#allocation5] sm:$0xff]
    %v43 = vld [vmem:[#allocation5 + $0x8] sm:$0xff]
    %v44 = vld [vmem:[#allocation5 + $0x10] sm:$0xff]
    %v45 = vld [vmem:[#allocation5 + $0x18] sm:$0xff]
    %v46 = vld [vmem:[#allocation2] sm:$0x7]
    %48 = vset.pattern.permute.xlu0 0
    %49 = vperm.xlu0 %48, %v42
    %v50 = vpop.permute.xlu0 %49
    %53 = vset.pattern.permute.xlu0 0
    %54 = vperm.xlu0 %53, %v43
    %v55 = vpop.permute.xlu0 %54
    %58 = vset.pattern.permute.xlu0 0
    %59 = vperm.xlu0 %58, %v44
    %v60 = vpop.permute.xlu0 %59
    %63 = vset.pattern.permute.xlu0 0
    %64 = vperm.xlu0 %63, %v45
    %v65 = vpop.permute.xlu0 %64
    %v67 = vperm.slane %v46, 0
    %v68 = vmul.f32 %v50, %v67
    %v69 = vmul.f32 %v55, %v67
    %v70 = vmul.f32 %v60, %v67
    %v71 = vmul.f32 %v65, %v67
    %72 = vset.pattern.permute.xlu0 1
    %73 = vperm.xlu0 %72, %v42
    %v74 = vpop.permute.xlu0 %73
    %76 = vset.pattern.permute.xlu0 1
    %77 = vperm.xlu0 %76, %v43
    %v78 = vpop.permute.xlu0 %77
    %80 = vset.pattern.permute.xlu0 1
    %81 = vperm.xlu0 %80, %v44
    %v82 = vpop.permute.xlu0 %81
    %84 = vset.pattern.permute.xlu0 1
    %85 = vperm.xlu0 %84, %v45
    %v86 = vpop.permute.xlu0 %85
    %v88 = vperm.slane %v46, 1
    %v89 = vmul.f32 %v74, %v88
    %v90 = vmul.f32 %v78, %v88
    %v91 = vmul.f32 %v82, %v88
    %v92 = vmul.f32 %v86, %v88
    %v93 = vadd.f32 %v68, %v89
    %v94 = vadd.f32 %v69, %v90
    %v95 = vadd.f32 %v70, %v91
    %v96 = vadd.f32 %v71, %v92
    %97 = vset.pattern.permute.xlu0 2
    %98 = vperm.xlu0 %97, %v42
    %v99 = vpop.permute.xlu0 %98
    %101 = vset.pattern.permute.xlu0 2
    %102 = vperm.xlu0 %101, %v43
    %v103 = vpop.permute.xlu0 %102
    %105 = vset.pattern.permute.xlu0 2
    %106 = vperm.xlu0 %105, %v44
    %v107 = vpop.permute.xlu0 %106
    %109 = vset.pattern.permute.xlu0 2
    %110 = vperm.xlu0 %109, %v45
    %v111 = vpop.permute.xlu0 %110
    %v113 = vperm.slane %v46, 2
    %v114 = vmul.f32 %v99, %v113
    %v115 = vmul.f32 %v103, %v113
    %v116 = vmul.f32 %v107, %v113
    %v117 = vmul.f32 %v111, %v113
    %v118 = vadd.f32 %v93, %v114
    %v119 = vadd.f32 %v94, %v115
    %v120 = vadd.f32 %v95, %v116
    %v121 = vadd.f32 %v96, %v117
    %122 = vset.pattern.permute.xlu0 3
    %123 = vperm.xlu0 %122, %v42
    %v124 = vpop.permute.xlu0 %123
    %126 = vset.pattern.permute.xlu0 3
    %127 = vperm.xlu0 %126, %v43
    %v128 = vpop.permute.xlu0 %127
    %130 = vset.pattern.permute.xlu0 3
    %131 = vperm.xlu0 %130, %v44
    %v132 = vpop.permute.xlu0 %131
    %134 = vset.pattern.permute.xlu0 3
    %135 = vperm.xlu0 %134, %v45
    %v136 = vpop.permute.xlu0 %135
    %v138 = vadd.f32 %v118, %v124
    %v139 = vadd.f32 %v119, %v128
    %v140 = vadd.f32 %v120, %v132
    %v141 = vadd.f32 %v121, %v136
    %v142 = vand.u32 2147483647, %v138
    %vm143 = vcmp.le.f32.partialorder %v142, 0.7853982
    %vm144 = vcmp.lt.s32.totalorder %v138, 0
    %v145 = vand.u32 %v138, 2139095040
    %v146 = vshrl.u32 %v145, 23
    %v147 = vsub.s32 %v146, 127
    %v148 = vand.u32 2147483647, %v138
    %v149 = vand.u32 %v148, 8388607
    %v150 = vor.u32 %v149, 8388608
    %v151 = vsub.s32 0, %v150
    %v152 = vadd.s32 %v147, 1
    %vm153 = vcmp.gt.s32.totalorder %v152, 0
    %v154 = vsel %vm153, %v152, 0
    %v155 = vshrl.u32 %v154, 5
    %v156 = vand.u32 %v154, 31
    %v157 = vsub.s32 32, %v156
    %v158 = vshrl.u32 683565275, %v157
    %v159 = vshll.u32 683565275, %v156
    %v160 = vshrl.u32 2475754826, %v157
    %v161 = vor.u32 %v159, %v160
    %v162 = vshll.u32 2475754826, %v156
    %v163 = vshrl.u32 2131351028, %v157
    %v164 = vor.u32 %v162, %v163
    %v165 = vshll.u32 2131351028, %v156
    %v166 = vshrl.u32 2102212464, %v157
    %v167 = vor.u32 %v165, %v166
    %v168 = vshll.u32 2102212464, %v156
    %v169 = vshrl.u32 920167782, %v157
    %v170 = vor.u32 %v168, %v169
    %v171 = vshll.u32 920167782, %v156
    %v172 = vshrl.u32 1326507024, %v157
    %v173 = vor.u32 %v171, %v172
    %vm174 = vcmp.lt.s32.totalorder %v155, 1
    %vm175 = vcmp.lt.s32.totalorder %v155, 2
    %vm176 = vcmp.lt.s32.totalorder %v155, 3
    %vm177 = vcmp.lt.s32.totalorder %v155, 4
    %v178 = vsel %vm174, %v158, %v161
    %v179 = vsel %vm177, %v167, 2102212464
    %v180 = vsel %vm176, %v164, %v179
    %v181 = vsel %vm175, %v178, %v180
    %v182 = vsel %vm174, %v161, %v164
    %v183 = vsel %vm177, %v170, 920167782
    %v184 = vsel %vm176, %v167, %v183
    %v185 = vsel %vm175, %v182, %v184
    %v186 = vsel %vm174, %v164, %v167
    %v187 = vsel %vm177, %v173, 1326507024
    %v188 = vsel %vm176, %v170, %v187
    %v189 = vsel %vm175, %v186, %v188
    %v190 = vshll.u32 %v150, 8
    %v191 = vand.u32 %v190, 65535
    %v192 = vshrl.u32 %v190, 16
    %v193 = vand.u32 %v189, 65535
    %v194 = vshrl.u32 %v189, 16
    %v195 = vmul.u32 %v191, %v193
    %v196 = vmul.u32 %v191, %v194
    %v197 = vmul.u32 %v192, %v193
    %v198 = vmul.u32 %v192, %v194
    %v199 = vshll.u32 %v196, 16
    %v200 = vshrl.u32 %v196, 16
    %v201 = vshll.u32 %v197, 16
    %v202 = vshrl.u32 %v197, 16
    %vm203 = vc.u32 %v195, %v199
    %v204 = vsel %vm203, 1, 0
    %v205 = vadd.s32 %v195, %v199
    %v206 = vadd.s32 %v198, %v204
    %vm207 = vc.u32 %v205, %v201
    %v208 = vsel %vm207, 1, 0
    %v209 = vadd.s32 %v205, %v201
    %v210 = vadd.s32 %v206, %v208
    %v211 = vadd.s32 %v210, %v200
    %v212 = vadd.s32 %v211, %v202
    %v213 = vand.u32 %v190, 65535
    %v214 = vshrl.u32 %v190, 16
    %v215 = vand.u32 %v185, 65535
    %v216 = vshrl.u32 %v185, 16
    %v217 = vmul.u32 %v213, %v215
    %v218 = vmul.u32 %v213, %v216
    %v219 = vmul.u32 %v214, %v215
    %v220 = vmul.u32 %v214, %v216
    %v221 = vshll.u32 %v218, 16
    %v222 = vshrl.u32 %v218, 16
    %v223 = vshll.u32 %v219, 16
    %v224 = vshrl.u32 %v219, 16
    %vm225 = vc.u32 %v217, %v221
    %v226 = vsel %vm225, 1, 0
    %v227 = vadd.s32 %v217, %v221
    %v228 = vadd.s32 %v220, %v226
    %vm229 = vc.u32 %v227, %v223
    %v230 = vsel %vm229, 1, 0
    %v231 = vadd.s32 %v227, %v223
    %v232 = vadd.s32 %v228, %v230
    %v233 = vadd.s32 %v232, %v222
    %v234 = vadd.s32 %v233, %v224
    %v235 = vmul.u32 %v190, %v181
    %v236 = vadd.s32 %v212, %v231
    %vm237 = vc.u32 %v212, %v231
    %v238 = vadd.s32 %v234, 1
    %v239 = vsel %vm237, %v238, %v234
    %v240 = vadd.s32 %v235, %v239
    %v241 = vadd.s32 %v240, 536870912
    %v242 = vshrl.u32 %v241, 30
    %v243 = vshll.u32 %v242, 30
    %v244 = vsub.s32 %v240, %v243
    %vm245 = vcmp.lt.s32.totalorder %v244, 0
    %v246 = vsub.s32 0, %v244
    %v247 = vsel %vm245, %v246, %v244
    %v248 = vclz %v247
    %v249 = vsub.s32 %v248, 2
    %vm250 = vcmp.gt.s32.totalorder 0, %v249
    %v251 = vsel %vm250, 0, %v249
    %v252 = vsub.s32 32, %v251
    %v253 = vshll.u32 %v244, %v251
    %v254 = vshrl.u32 %v236, %v252
    %v255 = vor.u32 %v253, %v254
    %v256 = vsub.s32 4294967266, %v251
    %v257 = vadd.s32 %v256, 127
    %v258 = vshll.u32 %v257, 23
    %v259 = vor.u32 4788187, %v258
    %v260 = vand.u32 2147483647, %v259
    %v262 = vcvt.s32.f32 %v255
    %v263 = vmul.f32 %v262, %v260
    %v264 = vxor.u32 %v263, 2147483648
    %v265 = vsel %vm144, %v264, %v263
    %v266 = vsub.s32 4, %v242
    %v267 = vsel %vm144, %v266, %v242
    %v268 = vsel %vm143, %v138, %v265
    %v269 = vsel %vm143, 0, %v267
    %v270 = vmul.f32 %v268, %v268
    %v271 = vmul.f32 %v270, -0.001358992
    %v272 = vadd.f32 %v271, 0.041655596
    %v273 = vmul.f32 %v270, %v272
    %v274 = vadd.f32 %v273, -0.4999988
    %v275 = vmul.f32 %v270, %v274
    %v276 = vadd.f32 1.0, %v275
    %v277 = vmul.f32 %v268, %v268
    %v278 = vmul.f32 %v277, -0.00019511016
    %v279 = vadd.f32 %v278, 0.008332121
    %v280 = vmul.f32 %v277, %v279
    %v281 = vadd.f32 %v280, -0.16666654
    %v282 = vmul.f32 %v277, %v281
    %v283 = vadd.f32 %v282, 1.0
    %v284 = vmul.f32 %v283, %v268
    %vm285 = vweird.f32 %v138
    %v286 = vadd.s32 %v269, 3
    %v287 = vand.u32 %v286, 3
    %vm288 = vcmp.lt.s32.totalorder %v287, 2
    %vm289 = vcmp.eq.s32.totalorder %v287, 0
    %v290 = vxor.u32 %v284, 2147483648
    %v291 = vsel %vm289, %v276, %v290
    %vm292 = vcmp.eq.s32.totalorder %v287, 2
    %v293 = vxor.u32 %v276, 2147483648
    %v294 = vsel %vm292, %v293, %v284
    %v295 = vsel %vm288, %v291, %v294
    %v296 = vsel %vm285, nan, %v295
    %v297 = vand.u32 2147483647, %v139
    %vm298 = vcmp.le.f32.partialorder %v297, 0.7853982
    %vm299 = vcmp.lt.s32.totalorder %v139, 0
    %v300 = vand.u32 %v139, 2139095040
    %v301 = vshrl.u32 %v300, 23
    %v302 = vsub.s32 %v301, 127
    %v303 = vand.u32 2147483647, %v139
    %v304 = vand.u32 %v303, 8388607
    %v305 = vor.u32 %v304, 8388608
    %v306 = vsub.s32 0, %v305
    %v307 = vadd.s32 %v302, 1
    %vm308 = vcmp.gt.s32.totalorder %v307, 0
    %v309 = vsel %vm308, %v307, 0
    %v310 = vshrl.u32 %v309, 5
    %v311 = vand.u32 %v309, 31
    %v312 = vsub.s32 32, %v311
    %v313 = vshrl.u32 683565275, %v312
    %v314 = vshll.u32 683565275, %v311
    %v315 = vshrl.u32 2475754826, %v312
    %v316 = vor.u32 %v314, %v315
    %v317 = vshll.u32 2475754826, %v311
    %v318 = vshrl.u32 2131351028, %v312
    %v319 = vor.u32 %v317, %v318
    %v320 = vshll.u32 2131351028, %v311
    %v321 = vshrl.u32 2102212464, %v312
    %v322 = vor.u32 %v320, %v321
    %v323 = vshll.u32 2102212464, %v311
    %v324 = vshrl.u32 920167782, %v312
    %v325 = vor.u32 %v323, %v324
    %v326 = vshll.u32 920167782, %v311
    %v327 = vshrl.u32 1326507024, %v312
    %v328 = vor.u32 %v326, %v327
    %vm329 = vcmp.lt.s32.totalorder %v310, 1
    %vm330 = vcmp.lt.s32.totalorder %v310, 2
    %vm331 = vcmp.lt.s32.totalorder %v310, 3
    %vm332 = vcmp.lt.s32.totalorder %v310, 4
    %v333 = vsel %vm329, %v313, %v316
    %v334 = vsel %vm332, %v322, 2102212464
    %v335 = vsel %vm331, %v319, %v334
    %v336 = vsel %vm330, %v333, %v335
    %v337 = vsel %vm329, %v316, %v319
    %v338 = vsel %vm332, %v325, 920167782
    %v339 = vsel %vm331, %v322, %v338
    %v340 = vsel %vm330, %v337, %v339
    %v341 = vsel %vm329, %v319, %v322
    %v342 = vsel %vm332, %v328, 1326507024
    %v343 = vsel %vm331, %v325, %v342
    %v344 = vsel %vm330, %v341, %v343
    %v345 = vshll.u32 %v305, 8
    %v346 = vand.u32 %v345, 65535
    %v347 = vshrl.u32 %v345, 16
    %v348 = vand.u32 %v344, 65535
    %v349 = vshrl.u32 %v344, 16
    %v350 = vmul.u32 %v346, %v348
    %v351 = vmul.u32 %v346, %v349
    %v352 = vmul.u32 %v347, %v348
    %v353 = vmul.u32 %v347, %v349
    %v354 = vshll.u32 %v351, 16
    %v355 = vshrl.u32 %v351, 16
    %v356 = vshll.u32 %v352, 16
    %v357 = vshrl.u32 %v352, 16
    %vm358 = vc.u32 %v350, %v354
    %v359 = vsel %vm358, 1, 0
    %v360 = vadd.s32 %v350, %v354
    %v361 = vadd.s32 %v353, %v359
    %vm362 = vc.u32 %v360, %v356
    %v363 = vsel %vm362, 1, 0
    %v364 = vadd.s32 %v360, %v356
    %v365 = vadd.s32 %v361, %v363
    %v366 = vadd.s32 %v365, %v355
    %v367 = vadd.s32 %v366, %v357
    %v368 = vand.u32 %v345, 65535
    %v369 = vshrl.u32 %v345, 16
    %v370 = vand.u32 %v340, 65535
    %v371 = vshrl.u32 %v340, 16
    %v372 = vmul.u32 %v368, %v370
    %v373 = vmul.u32 %v368, %v371
    %v374 = vmul.u32 %v369, %v370
    %v375 = vmul.u32 %v369, %v371
    %v376 = vshll.u32 %v373, 16
    %v377 = vshrl.u32 %v373, 16
    %v378 = vshll.u32 %v374, 16
    %v379 = vshrl.u32 %v374, 16
    %vm380 = vc.u32 %v372, %v376
    %v381 = vsel %vm380, 1, 0
    %v382 = vadd.s32 %v372, %v376
    %v383 = vadd.s32 %v375, %v381
    %vm384 = vc.u32 %v382, %v378
    %v385 = vsel %vm384, 1, 0
    %v386 = vadd.s32 %v382, %v378
    %v387 = vadd.s32 %v383, %v385
    %v388 = vadd.s32 %v387, %v377
    %v389 = vadd.s32 %v388, %v379
    %v390 = vmul.u32 %v345, %v336
    %v391 = vadd.s32 %v367, %v386
    %vm392 = vc.u32 %v367, %v386
    %v393 = vadd.s32 %v389, 1
    %v394 = vsel %vm392, %v393, %v389
    %v395 = vadd.s32 %v390, %v394
    %v396 = vadd.s32 %v395, 536870912
    %v397 = vshrl.u32 %v396, 30
    %v398 = vshll.u32 %v397, 30
    %v399 = vsub.s32 %v395, %v398
    %vm400 = vcmp.lt.s32.totalorder %v399, 0
    %v401 = vsub.s32 0, %v399
    %v402 = vsel %vm400, %v401, %v399
    %v403 = vclz %v402
    %v404 = vsub.s32 %v403, 2
    %vm405 = vcmp.gt.s32.totalorder 0, %v404
    %v406 = vsel %vm405, 0, %v404
    %v407 = vsub.s32 32, %v406
    %v408 = vshll.u32 %v399, %v406
    %v409 = vshrl.u32 %v391, %v407
    %v410 = vor.u32 %v408, %v409
    %v411 = vsub.s32 4294967266, %v406
    %v412 = vadd.s32 %v411, 127
    %v413 = vshll.u32 %v412, 23
    %v414 = vor.u32 4788187, %v413
    %v415 = vand.u32 2147483647, %v414
    %v417 = vcvt.s32.f32 %v410
    %v418 = vmul.f32 %v417, %v415
    %v419 = vxor.u32 %v418, 2147483648
    %v420 = vsel %vm299, %v419, %v418
    %v421 = vsub.s32 4, %v397
    %v422 = vsel %vm299, %v421, %v397
    %v423 = vsel %vm298, %v139, %v420
    %v424 = vsel %vm298, 0, %v422
    %v425 = vmul.f32 %v423, %v423
    %v426 = vmul.f32 %v425, -0.001358992
    %v427 = vadd.f32 %v426, 0.041655596
    %v428 = vmul.f32 %v425, %v427
    %v429 = vadd.f32 %v428, -0.4999988
    %v430 = vmul.f32 %v425, %v429
    %v431 = vadd.f32 1.0, %v430
    %v432 = vmul.f32 %v423, %v423
    %v433 = vmul.f32 %v432, -0.00019511016
    %v434 = vadd.f32 %v433, 0.008332121
    %v435 = vmul.f32 %v432, %v434
    %v436 = vadd.f32 %v435, -0.16666654
    %v437 = vmul.f32 %v432, %v436
    %v438 = vadd.f32 %v437, 1.0
    %v439 = vmul.f32 %v438, %v423
    %vm440 = vweird.f32 %v139
    %v441 = vadd.s32 %v424, 3
    %v442 = vand.u32 %v441, 3
    %vm443 = vcmp.lt.s32.totalorder %v442, 2
    %vm444 = vcmp.eq.s32.totalorder %v442, 0
    %v445 = vxor.u32 %v439, 2147483648
    %v446 = vsel %vm444, %v431, %v445
    %vm447 = vcmp.eq.s32.totalorder %v442, 2
    %v448 = vxor.u32 %v431, 2147483648
    %v449 = vsel %vm447, %v448, %v439
    %v450 = vsel %vm443, %v446, %v449
    %v451 = vsel %vm440, nan, %v450
    %v452 = vand.u32 2147483647, %v140
    %vm453 = vcmp.le.f32.partialorder %v452, 0.7853982
    %vm454 = vcmp.lt.s32.totalorder %v140, 0
    %v455 = vand.u32 %v140, 2139095040
    %v456 = vshrl.u32 %v455, 23
    %v457 = vsub.s32 %v456, 127
    %v458 = vand.u32 2147483647, %v140
    %v459 = vand.u32 %v458, 8388607
    %v460 = vor.u32 %v459, 8388608
    %v461 = vsub.s32 0, %v460
    %v462 = vadd.s32 %v457, 1
    %vm463 = vcmp.gt.s32.totalorder %v462, 0
    %v464 = vsel %vm463, %v462, 0
    %v465 = vshrl.u32 %v464, 5
    %v466 = vand.u32 %v464, 31
    %v467 = vsub.s32 32, %v466
    %v468 = vshrl.u32 683565275, %v467
    %v469 = vshll.u32 683565275, %v466
    %v470 = vshrl.u32 2475754826, %v467
    %v471 = vor.u32 %v469, %v470
    %v472 = vshll.u32 2475754826, %v466
    %v473 = vshrl.u32 2131351028, %v467
    %v474 = vor.u32 %v472, %v473
    %v475 = vshll.u32 2131351028, %v466
    %v476 = vshrl.u32 2102212464, %v467
    %v477 = vor.u32 %v475, %v476
    %v478 = vshll.u32 2102212464, %v466
    %v479 = vshrl.u32 920167782, %v467
    %v480 = vor.u32 %v478, %v479
    %v481 = vshll.u32 920167782, %v466
    %v482 = vshrl.u32 1326507024, %v467
    %v483 = vor.u32 %v481, %v482
    %vm484 = vcmp.lt.s32.totalorder %v465, 1
    %vm485 = vcmp.lt.s32.totalorder %v465, 2
    %vm486 = vcmp.lt.s32.totalorder %v465, 3
    %vm487 = vcmp.lt.s32.totalorder %v465, 4
    %v488 = vsel %vm484, %v468, %v471
    %v489 = vsel %vm487, %v477, 2102212464
    %v490 = vsel %vm486, %v474, %v489
    %v491 = vsel %vm485, %v488, %v490
    %v492 = vsel %vm484, %v471, %v474
    %v493 = vsel %vm487, %v480, 920167782
    %v494 = vsel %vm486, %v477, %v493
    %v495 = vsel %vm485, %v492, %v494
    %v496 = vsel %vm484, %v474, %v477
    %v497 = vsel %vm487, %v483, 1326507024
    %v498 = vsel %vm486, %v480, %v497
    %v499 = vsel %vm485, %v496, %v498
    %v500 = vshll.u32 %v460, 8
    %v501 = vand.u32 %v500, 65535
    %v502 = vshrl.u32 %v500, 16
    %v503 = vand.u32 %v499, 65535
    %v504 = vshrl.u32 %v499, 16
    %v505 = vmul.u32 %v501, %v503
    %v506 = vmul.u32 %v501, %v504
    %v507 = vmul.u32 %v502, %v503
    %v508 = vmul.u32 %v502, %v504
    %v509 = vshll.u32 %v506, 16
    %v510 = vshrl.u32 %v506, 16
    %v511 = vshll.u32 %v507, 16
    %v512 = vshrl.u32 %v507, 16
    %vm513 = vc.u32 %v505, %v509
    %v514 = vsel %vm513, 1, 0
    %v515 = vadd.s32 %v505, %v509
    %v516 = vadd.s32 %v508, %v514
    %vm517 = vc.u32 %v515, %v511
    %v518 = vsel %vm517, 1, 0
    %v519 = vadd.s32 %v515, %v511
    %v520 = vadd.s32 %v516, %v518
    %v521 = vadd.s32 %v520, %v510
    %v522 = vadd.s32 %v521, %v512
    %v523 = vand.u32 %v500, 65535
    %v524 = vshrl.u32 %v500, 16
    %v525 = vand.u32 %v495, 65535
    %v526 = vshrl.u32 %v495, 16
    %v527 = vmul.u32 %v523, %v525
    %v528 = vmul.u32 %v523, %v526
    %v529 = vmul.u32 %v524, %v525
    %v530 = vmul.u32 %v524, %v526
    %v531 = vshll.u32 %v528, 16
    %v532 = vshrl.u32 %v528, 16
    %v533 = vshll.u32 %v529, 16
    %v534 = vshrl.u32 %v529, 16
    %vm535 = vc.u32 %v527, %v531
    %v536 = vsel %vm535, 1, 0
    %v537 = vadd.s32 %v527, %v531
    %v538 = vadd.s32 %v530, %v536
    %vm539 = vc.u32 %v537, %v533
    %v540 = vsel %vm539, 1, 0
    %v541 = vadd.s32 %v537, %v533
    %v542 = vadd.s32 %v538, %v540
    %v543 = vadd.s32 %v542, %v532
    %v544 = vadd.s32 %v543, %v534
    %v545 = vmul.u32 %v500, %v491
    %v546 = vadd.s32 %v522, %v541
    %vm547 = vc.u32 %v522, %v541
    %v548 = vadd.s32 %v544, 1
    %v549 = vsel %vm547, %v548, %v544
    %v550 = vadd.s32 %v545, %v549
    %v551 = vadd.s32 %v550, 536870912
    %v552 = vshrl.u32 %v551, 30
    %v553 = vshll.u32 %v552, 30
    %v554 = vsub.s32 %v550, %v553
    %vm555 = vcmp.lt.s32.totalorder %v554, 0
    %v556 = vsub.s32 0, %v554
    %v557 = vsel %vm555, %v556, %v554
    %v558 = vclz %v557
    %v559 = vsub.s32 %v558, 2
    %vm560 = vcmp.gt.s32.totalorder 0, %v559
    %v561 = vsel %vm560, 0, %v559
    %v562 = vsub.s32 32, %v561
    %v563 = vshll.u32 %v554, %v561
    %v564 = vshrl.u32 %v546, %v562
    %v565 = vor.u32 %v563, %v564
    %v566 = vsub.s32 4294967266, %v561
    %v567 = vadd.s32 %v566, 127
    %v568 = vshll.u32 %v567, 23
    %v569 = vor.u32 4788187, %v568
    %v570 = vand.u32 2147483647, %v569
    %v572 = vcvt.s32.f32 %v565
    %v573 = vmul.f32 %v572, %v570
    %v574 = vxor.u32 %v573, 2147483648
    %v575 = vsel %vm454, %v574, %v573
    %v576 = vsub.s32 4, %v552
    %v577 = vsel %vm454, %v576, %v552
    %v578 = vsel %vm453, %v140, %v575
    %v579 = vsel %vm453, 0, %v577
    %v580 = vmul.f32 %v578, %v578
    %v581 = vmul.f32 %v580, -0.001358992
    %v582 = vadd.f32 %v581, 0.041655596
    %v583 = vmul.f32 %v580, %v582
    %v584 = vadd.f32 %v583, -0.4999988
    %v585 = vmul.f32 %v580, %v584
    %v586 = vadd.f32 1.0, %v585
    %v587 = vmul.f32 %v578, %v578
    %v588 = vmul.f32 %v587, -0.00019511016
    %v589 = vadd.f32 %v588, 0.008332121
    %v590 = vmul.f32 %v587, %v589
    %v591 = vadd.f32 %v590, -0.16666654
    %v592 = vmul.f32 %v587, %v591
    %v593 = vadd.f32 %v592, 1.0
    %v594 = vmul.f32 %v593, %v578
    %vm595 = vweird.f32 %v140
    %v596 = vadd.s32 %v579, 3
    %v597 = vand.u32 %v596, 3
    %vm598 = vcmp.lt.s32.totalorder %v597, 2
    %vm599 = vcmp.eq.s32.totalorder %v597, 0
    %v600 = vxor.u32 %v594, 2147483648
    %v601 = vsel %vm599, %v586, %v600
    %vm602 = vcmp.eq.s32.totalorder %v597, 2
    %v603 = vxor.u32 %v586, 2147483648
    %v604 = vsel %vm602, %v603, %v594
    %v605 = vsel %vm598, %v601, %v604
    %v606 = vsel %vm595, nan, %v605
    %v607 = vand.u32 2147483647, %v141
    %vm608 = vcmp.le.f32.partialorder %v607, 0.7853982
    %vm609 = vcmp.lt.s32.totalorder %v141, 0
    %v610 = vand.u32 %v141, 2139095040
    %v611 = vshrl.u32 %v610, 23
    %v612 = vsub.s32 %v611, 127
    %v613 = vand.u32 2147483647, %v141
    %v614 = vand.u32 %v613, 8388607
    %v615 = vor.u32 %v614, 8388608
    %v616 = vsub.s32 0, %v615
    %v617 = vadd.s32 %v612, 1
    %vm618 = vcmp.gt.s32.totalorder %v617, 0
    %v619 = vsel %vm618, %v617, 0
    %v620 = vshrl.u32 %v619, 5
    %v621 = vand.u32 %v619, 31
    %v622 = vsub.s32 32, %v621
    %v623 = vshrl.u32 683565275, %v622
    %v624 = vshll.u32 683565275, %v621
    %v625 = vshrl.u32 2475754826, %v622
    %v626 = vor.u32 %v624, %v625
    %v627 = vshll.u32 2475754826, %v621
    %v628 = vshrl.u32 2131351028, %v622
    %v629 = vor.u32 %v627, %v628
    %v630 = vshll.u32 2131351028, %v621
    %v631 = vshrl.u32 2102212464, %v622
    %v632 = vor.u32 %v630, %v631
    %v633 = vshll.u32 2102212464, %v621
    %v634 = vshrl.u32 920167782, %v622
    %v635 = vor.u32 %v633, %v634
    %v636 = vshll.u32 920167782, %v621
    %v637 = vshrl.u32 1326507024, %v622
    %v638 = vor.u32 %v636, %v637
    %vm639 = vcmp.lt.s32.totalorder %v620, 1
    %vm640 = vcmp.lt.s32.totalorder %v620, 2
    %vm641 = vcmp.lt.s32.totalorder %v620, 3
    %vm642 = vcmp.lt.s32.totalorder %v620, 4
    %v643 = vsel %vm639, %v623, %v626
    %v644 = vsel %vm642, %v632, 2102212464
    %v645 = vsel %vm641, %v629, %v644
    %v646 = vsel %vm640, %v643, %v645
    %v647 = vsel %vm639, %v626, %v629
    %v648 = vsel %vm642, %v635, 920167782
    %v649 = vsel %vm641, %v632, %v648
    %v650 = vsel %vm640, %v647, %v649
    %v651 = vsel %vm639, %v629, %v632
    %v652 = vsel %vm642, %v638, 1326507024
    %v653 = vsel %vm641, %v635, %v652
    %v654 = vsel %vm640, %v651, %v653
    %v655 = vshll.u32 %v615, 8
    %v656 = vand.u32 %v655, 65535
    %v657 = vshrl.u32 %v655, 16
    %v658 = vand.u32 %v654, 65535
    %v659 = vshrl.u32 %v654, 16
    %v660 = vmul.u32 %v656, %v658
    %v661 = vmul.u32 %v656, %v659
    %v662 = vmul.u32 %v657, %v658
    %v663 = vmul.u32 %v657, %v659
    %v664 = vshll.u32 %v661, 16
    %v665 = vshrl.u32 %v661, 16
    %v666 = vshll.u32 %v662, 16
    %v667 = vshrl.u32 %v662, 16
    %vm668 = vc.u32 %v660, %v664
    %v669 = vsel %vm668, 1, 0
    %v670 = vadd.s32 %v660, %v664
    %v671 = vadd.s32 %v663, %v669
    %vm672 = vc.u32 %v670, %v666
    %v673 = vsel %vm672, 1, 0
    %v674 = vadd.s32 %v670, %v666
    %v675 = vadd.s32 %v671, %v673
    %v676 = vadd.s32 %v675, %v665
    %v677 = vadd.s32 %v676, %v667
    %v678 = vand.u32 %v655, 65535
    %v679 = vshrl.u32 %v655, 16
    %v680 = vand.u32 %v650, 65535
    %v681 = vshrl.u32 %v650, 16
    %v682 = vmul.u32 %v678, %v680
    %v683 = vmul.u32 %v678, %v681
    %v684 = vmul.u32 %v679, %v680
    %v685 = vmul.u32 %v679, %v681
    %v686 = vshll.u32 %v683, 16
    %v687 = vshrl.u32 %v683, 16
    %v688 = vshll.u32 %v684, 16
    %v689 = vshrl.u32 %v684, 16
    %vm690 = vc.u32 %v682, %v686
    %v691 = vsel %vm690, 1, 0
    %v692 = vadd.s32 %v682, %v686
    %v693 = vadd.s32 %v685, %v691
    %vm694 = vc.u32 %v692, %v688
    %v695 = vsel %vm694, 1, 0
    %v696 = vadd.s32 %v692, %v688
    %v697 = vadd.s32 %v693, %v695
    %v698 = vadd.s32 %v697, %v687
    %v699 = vadd.s32 %v698, %v689
    %v700 = vmul.u32 %v655, %v646
    %v701 = vadd.s32 %v677, %v696
    %vm702 = vc.u32 %v677, %v696
    %v703 = vadd.s32 %v699, 1
    %v704 = vsel %vm702, %v703, %v699
    %v705 = vadd.s32 %v700, %v704
    %v706 = vadd.s32 %v705, 536870912
    %v707 = vshrl.u32 %v706, 30
    %v708 = vshll.u32 %v707, 30
    %v709 = vsub.s32 %v705, %v708
    %vm710 = vcmp.lt.s32.totalorder %v709, 0
    %v711 = vsub.s32 0, %v709
    %v712 = vsel %vm710, %v711, %v709
    %v713 = vclz %v712
    %v714 = vsub.s32 %v713, 2
    %vm715 = vcmp.gt.s32.totalorder 0, %v714
    %v716 = vsel %vm715, 0, %v714
    %v717 = vsub.s32 32, %v716
    %v718 = vshll.u32 %v709, %v716
    %v719 = vshrl.u32 %v701, %v717
    %v720 = vor.u32 %v718, %v719
    %v721 = vsub.s32 4294967266, %v716
    %v722 = vadd.s32 %v721, 127
    %v723 = vshll.u32 %v722, 23
    %v724 = vor.u32 4788187, %v723
    %v725 = vand.u32 2147483647, %v724
    %v727 = vcvt.s32.f32 %v720
    %v728 = vmul.f32 %v727, %v725
    %v729 = vxor.u32 %v728, 2147483648
    %v730 = vsel %vm609, %v729, %v728
    %v731 = vsub.s32 4, %v707
    %v732 = vsel %vm609, %v731, %v707
    %v733 = vsel %vm608, %v141, %v730
    %v734 = vsel %vm608, 0, %v732
    %v735 = vmul.f32 %v733, %v733
    %v736 = vmul.f32 %v735, -0.001358992
    %v737 = vadd.f32 %v736, 0.041655596
    %v738 = vmul.f32 %v735, %v737
    %v739 = vadd.f32 %v738, -0.4999988
    %v740 = vmul.f32 %v735, %v739
    %v741 = vadd.f32 1.0, %v740
    %v742 = vmul.f32 %v733, %v733
    %v743 = vmul.f32 %v742, -0.00019511016
    %v744 = vadd.f32 %v743, 0.008332121
    %v745 = vmul.f32 %v742, %v744
    %v746 = vadd.f32 %v745, -0.16666654
    %v747 = vmul.f32 %v742, %v746
    %v748 = vadd.f32 %v747, 1.0
    %v749 = vmul.f32 %v748, %v733
    %vm750 = vweird.f32 %v141
    %v751 = vadd.s32 %v734, 3
    %v752 = vand.u32 %v751, 3
    %vm753 = vcmp.lt.s32.totalorder %v752, 2
    %vm754 = vcmp.eq.s32.totalorder %v752, 0
    %v755 = vxor.u32 %v749, 2147483648
    %v756 = vsel %vm754, %v741, %v755
    %vm757 = vcmp.eq.s32.totalorder %v752, 2
    %v758 = vxor.u32 %v741, 2147483648
    %v759 = vsel %vm757, %v758, %v749
    %v760 = vsel %vm753, %v756, %v759
    %v761 = vsel %vm750, nan, %v760
    %762 = vset.pattern.permute.xlu0 36
    %763 = vperm.xlu0 %762, %v42
    %v764 = vpop.permute.xlu0 %763
    %766 = vset.pattern.permute.xlu0 36
    %767 = vperm.xlu0 %766, %v43
    %v768 = vpop.permute.xlu0 %767
    %770 = vset.pattern.permute.xlu0 36
    %771 = vperm.xlu0 %770, %v44
    %v772 = vpop.permute.xlu0 %771
    %774 = vset.pattern.permute.xlu0 36
    %775 = vperm.xlu0 %774, %v45
    %v776 = vpop.permute.xlu0 %775
    %v778 = vmul.f32 %v764, %v67
    %v779 = vmul.f32 %v768, %v67
    %v780 = vmul.f32 %v772, %v67
    %v781 = vmul.f32 %v776, %v67
    %782 = vset.pattern.permute.xlu0 37
    %783 = vperm.xlu0 %782, %v42
    %v784 = vpop.permute.xlu0 %783
    %786 = vset.pattern.permute.xlu0 37
    %787 = vperm.xlu0 %786, %v43
    %v788 = vpop.permute.xlu0 %787
    %790 = vset.pattern.permute.xlu0 37
    %791 = vperm.xlu0 %790, %v44
    %v792 = vpop.permute.xlu0 %791
    %794 = vset.pattern.permute.xlu0 37
    %795 = vperm.xlu0 %794, %v45
    %v796 = vpop.permute.xlu0 %795
    %v798 = vmul.f32 %v784, %v88
    %v799 = vmul.f32 %v788, %v88
    %v800 = vmul.f32 %v792, %v88
    %v801 = vmul.f32 %v796, %v88
    %v802 = vadd.f32 %v778, %v798
    %v803 = vadd.f32 %v779, %v799
    %v804 = vadd.f32 %v780, %v800
    %v805 = vadd.f32 %v781, %v801
    %806 = vset.pattern.permute.xlu0 38
    %807 = vperm.xlu0 %806, %v42
    %v808 = vpop.permute.xlu0 %807
    %810 = vset.pattern.permute.xlu0 38
    %811 = vperm.xlu0 %810, %v43
    %v812 = vpop.permute.xlu0 %811
    %814 = vset.pattern.permute.xlu0 38
    %815 = vperm.xlu0 %814, %v44
    %v816 = vpop.permute.xlu0 %815
    %818 = vset.pattern.permute.xlu0 38
    %819 = vperm.xlu0 %818, %v45
    %v820 = vpop.permute.xlu0 %819
    %v822 = vmul.f32 %v808, %v113
    %v823 = vmul.f32 %v812, %v113
    %v824 = vmul.f32 %v816, %v113
    %v825 = vmul.f32 %v820, %v113
    %v826 = vadd.f32 %v802, %v822
    %v827 = vadd.f32 %v803, %v823
    %v828 = vadd.f32 %v804, %v824
    %v829 = vadd.f32 %v805, %v825
    %830 = vrot.lane.b32.xlu0 %v42, 124
    %v831 = vpop.permute.xlu0 %830
    %832 = vrot.lane.b32.xlu0 %v43, 124
    %v833 = vpop.permute.xlu0 %832
    %834 = vrot.lane.b32.xlu0 %v44, 124
    %v835 = vpop.permute.xlu0 %834
    %836 = vrot.lane.b32.xlu0 %v45, 124
    %v837 = vpop.permute.xlu0 %836
    %vm838 = vcmask 261120
    %v839 = vsel %vm838, %v831, 0
    %v841 = vsel %vm838, %v833, 0
    %v843 = vsel %vm838, %v835, 0
    %v845 = vsel %vm838, %v837, 0
    %847 = vmatpush.msra.mxu0 0.0
    %848 = vmatpush.msra.mxu0 0.0
    %849 = vmatpush.msra.mxu0 0.0
    %850 = vmatpush.msra.mxu0 0.0
    %851 = vmatpush.msra.mxu0 0.0
    %852 = vmatpush.msra.mxu0 0.0
    %853 = vmatpush.msra.mxu0 0.0
    %854 = vmatpush.msra.mxu0 0.0
    %855 = vmatpush.msra.mxu0 0.0
    %856 = vmatpush.msra.mxu0 0.0
    %857 = vmatpush.msra.mxu0 0.0
    %858 = vmatpush.msra.mxu0 0.0
    %v859 = vand.u32 %v761, 4294901760
    %860 = vmatpush.msra.mxu0 %v859
    %v861 = vand.u32 %v606, 4294901760
    %862 = vmatpush.msra.mxu0 %v861
    %v863 = vand.u32 %v451, 4294901760
    %864 = vmatpush.msra.mxu0 %v863
    %v865 = vand.u32 %v296, 4294901760
    %866 = vmatpush.msra.mxu0 %v865
    %v867 = vand.u32 %v839, 4294901760
    %v868 = vsub.f32 %v839, %v867
    %v869 = vand.u32 %v868, 4294901760
    %v870 = vsub.f32 %v868, %v869
    %v871 = vand.u32 %v870, 4294901760
    %872 = vmatmul.f32.gmra.mxu0 %v871
    %v873 = vpop.f32.mrf.mxu0
    %v874 = vadd.f32 %v826, %v873
    %v875 = vand.u32 %v841, 4294901760
    %v876 = vsub.f32 %v841, %v875
    %v877 = vand.u32 %v876, 4294901760
    %v878 = vsub.f32 %v876, %v877
    %v879 = vand.u32 %v878, 4294901760
    %880 = vmatmul.f32.gmra.mxu0 %v879
    %v881 = vpop.f32.mrf.mxu0
    %v882 = vadd.f32 %v827, %v881
    %v883 = vand.u32 %v843, 4294901760
    %v884 = vsub.f32 %v843, %v883
    %v885 = vand.u32 %v884, 4294901760
    %v886 = vsub.f32 %v884, %v885
    %v887 = vand.u32 %v886, 4294901760
    %888 = vmatmul.f32.gmra.mxu0 %v887
    %v889 = vpop.f32.mrf.mxu0
    %v890 = vadd.f32 %v828, %v889
    %v891 = vand.u32 %v845, 4294901760
    %v892 = vsub.f32 %v845, %v891
    %v893 = vand.u32 %v892, 4294901760
    %v894 = vsub.f32 %v892, %v893
    %v895 = vand.u32 %v894, 4294901760
    %896 = vmatmul.f32.gmra.mxu0 %v895
    %v897 = vpop.f32.mrf.mxu0
    %v898 = vadd.f32 %v829, %v897
    %899 = vdwg.mxu0
    %900 = vmatpush.msra.mxu0 0.0
    %901 = vmatpush.msra.mxu0 0.0
    %902 = vmatpush.msra.mxu0 0.0
    %903 = vmatpush.msra.mxu0 0.0
    %904 = vmatpush.msra.mxu0 0.0
    %905 = vmatpush.msra.mxu0 0.0
    %906 = vmatpush.msra.mxu0 0.0
    %907 = vmatpush.msra.mxu0 0.0
    %908 = vmatpush.msra.mxu0 0.0
    %909 = vmatpush.msra.mxu0 0.0
    %910 = vmatpush.msra.mxu0 0.0
    %911 = vmatpush.msra.mxu0 0.0
    %v912 = vand.u32 %v761, 4294901760
    %v913 = vsub.f32 %v761, %v912
    %v914 = vand.u32 %v913, 4294901760
    %v915 = vsub.f32 %v913, %v914
    %v916 = vand.u32 %v915, 4294901760
    %917 = vmatpush.msra.mxu0 %v916
    %v918 = vand.u32 %v606, 4294901760
    %v919 = vsub.f32 %v606, %v918
    %v920 = vand.u32 %v919, 4294901760
    %v921 = vsub.f32 %v919, %v920
    %v922 = vand.u32 %v921, 4294901760
    %923 = vmatpush.msra.mxu0 %v922
    %v924 = vand.u32 %v451, 4294901760
    %v925 = vsub.f32 %v451, %v924
    %v926 = vand.u32 %v925, 4294901760
    %v927 = vsub.f32 %v925, %v926
    %v928 = vand.u32 %v927, 4294901760
    %929 = vmatpush.msra.mxu0 %v928
    %v930 = vand.u32 %v296, 4294901760
    %v931 = vsub.f32 %v296, %v930
    %v932 = vand.u32 %v931, 4294901760
    %v933 = vsub.f32 %v931, %v932
    %v934 = vand.u32 %v933, 4294901760
    %935 = vmatpush.msra.mxu0 %v934
    %v936 = vand.u32 %v839, 4294901760
    %937 = vmatmul.f32.gmra.mxu0 %v936
    %v938 = vpop.f32.mrf.mxu0
    %v939 = vadd.f32 %v874, %v938
    %v940 = vand.u32 %v841, 4294901760
    %941 = vmatmul.f32.gmra.mxu0 %v940
    %v942 = vpop.f32.mrf.mxu0
    %v943 = vadd.f32 %v882, %v942
    %v944 = vand.u32 %v843, 4294901760
    %945 = vmatmul.f32.gmra.mxu0 %v944
    %v946 = vpop.f32.mrf.mxu0
    %v947 = vadd.f32 %v890, %v946
    %v948 = vand.u32 %v845, 4294901760
    %949 = vmatmul.f32.gmra.mxu0 %v948
    %v950 = vpop.f32.mrf.mxu0
    %v951 = vadd.f32 %v898, %v950
    %952 = vdwg.mxu0
    %953 = vmatpush.msra.mxu0 0.0
    %954 = vmatpush.msra.mxu0 0.0
    %955 = vmatpush.msra.mxu0 0.0
    %956 = vmatpush.msra.mxu0 0.0
    %957 = vmatpush.msra.mxu0 0.0
    %958 = vmatpush.msra.mxu0 0.0
    %959 = vmatpush.msra.mxu0 0.0
    %960 = vmatpush.msra.mxu0 0.0
    %961 = vmatpush.msra.mxu0 0.0
    %962 = vmatpush.msra.mxu0 0.0
    %963 = vmatpush.msra.mxu0 0.0
    %964 = vmatpush.msra.mxu0 0.0
    %v965 = vand.u32 %v761, 4294901760
    %v966 = vsub.f32 %v761, %v965
    %967 = vmatpush.msra.mxu0 %v966
    %v968 = vand.u32 %v606, 4294901760
    %v969 = vsub.f32 %v606, %v968
    %970 = vmatpush.msra.mxu0 %v969
    %v971 = vand.u32 %v451, 4294901760
    %v972 = vsub.f32 %v451, %v971
    %973 = vmatpush.msra.mxu0 %v972
    %v974 = vand.u32 %v296, 4294901760
    %v975 = vsub.f32 %v296, %v974
    %976 = vmatpush.msra.mxu0 %v975
    %v977 = vand.u32 %v839, 4294901760
    %v978 = vsub.f32 %v839, %v977
    %979 = vmatmul.f32.gmra.mxu0 %v978
    %v980 = vpop.f32.mrf.mxu0
    %v981 = vadd.f32 %v939, %v980
    %v982 = vand.u32 %v841, 4294901760
    %v983 = vsub.f32 %v841, %v982
    %984 = vmatmul.f32.gmra.mxu0 %v983
    %v985 = vpop.f32.mrf.mxu0
    %v986 = vadd.f32 %v943, %v985
    %v987 = vand.u32 %v843, 4294901760
    %v988 = vsub.f32 %v843, %v987
    %989 = vmatmul.f32.gmra.mxu0 %v988
    %v990 = vpop.f32.mrf.mxu0
    %v991 = vadd.f32 %v947, %v990
    %v992 = vand.u32 %v845, 4294901760
    %v993 = vsub.f32 %v845, %v992
    %994 = vmatmul.f32.gmra.mxu0 %v993
    %v995 = vpop.f32.mrf.mxu0
    %v996 = vadd.f32 %v951, %v995
    %997 = vdwg.mxu0
    %998 = vmatpush.msra.mxu0 0.0
    %999 = vmatpush.msra.mxu0 0.0
    %1000 = vmatpush.msra.mxu0 0.0
    %1001 = vmatpush.msra.mxu0 0.0
    %1002 = vmatpush.msra.mxu0 0.0
    %1003 = vmatpush.msra.mxu0 0.0
    %1004 = vmatpush.msra.mxu0 0.0
    %1005 = vmatpush.msra.mxu0 0.0
    %1006 = vmatpush.msra.mxu0 0.0
    %1007 = vmatpush.msra.mxu0 0.0
    %1008 = vmatpush.msra.mxu0 0.0
    %1009 = vmatpush.msra.mxu0 0.0
    %v1010 = vand.u32 %v761, 4294901760
    %1011 = vmatpush.msra.mxu0 %v1010
    %v1012 = vand.u32 %v606, 4294901760
    %1013 = vmatpush.msra.mxu0 %v1012
    %v1014 = vand.u32 %v451, 4294901760
    %1015 = vmatpush.msra.mxu0 %v1014
    %v1016 = vand.u32 %v296, 4294901760
    %1017 = vmatpush.msra.mxu0 %v1016
    %v1018 = vand.u32 %v839, 4294901760
    %v1019 = vsub.f32 %v839, %v1018
    %v1020 = vand.u32 %v1019, 4294901760
    %1021 = vmatmul.f32.gmra.mxu0 %v1020
    %v1022 = vpop.f32.mrf.mxu0
    %v1023 = vadd.f32 %v981, %v1022
    %v1024 = vand.u32 %v841, 4294901760
    %v1025 = vsub.f32 %v841, %v1024
    %v1026 = vand.u32 %v1025, 4294901760
    %1027 = vmatmul.f32.gmra.mxu0 %v1026
    %v1028 = vpop.f32.mrf.mxu0
    %v1029 = vadd.f32 %v986, %v1028
    %v1030 = vand.u32 %v843, 4294901760
    %v1031 = vsub.f32 %v843, %v1030
    %v1032 = vand.u32 %v1031, 4294901760
    %1033 = vmatmul.f32.gmra.mxu0 %v1032
    %v1034 = vpop.f32.mrf.mxu0
    %v1035 = vadd.f32 %v991, %v1034
    %v1036 = vand.u32 %v845, 4294901760
    %v1037 = vsub.f32 %v845, %v1036
    %v1038 = vand.u32 %v1037, 4294901760
    %1039 = vmatmul.f32.gmra.mxu0 %v1038
    %v1040 = vpop.f32.mrf.mxu0
    %v1041 = vadd.f32 %v996, %v1040
    %1042 = vdwg.mxu0
    %1043 = vmatpush.msra.mxu0 0.0
    %1044 = vmatpush.msra.mxu0 0.0
    %1045 = vmatpush.msra.mxu0 0.0
    %1046 = vmatpush.msra.mxu0 0.0
    %1047 = vmatpush.msra.mxu0 0.0
    %1048 = vmatpush.msra.mxu0 0.0
    %1049 = vmatpush.msra.mxu0 0.0
    %1050 = vmatpush.msra.mxu0 0.0
    %1051 = vmatpush.msra.mxu0 0.0
    %1052 = vmatpush.msra.mxu0 0.0
    %1053 = vmatpush.msra.mxu0 0.0
    %1054 = vmatpush.msra.mxu0 0.0
    %v1055 = vand.u32 %v761, 4294901760
    %v1056 = vsub.f32 %v761, %v1055
    %v1057 = vand.u32 %v1056, 4294901760
    %1058 = vmatpush.msra.mxu0 %v1057
    %v1059 = vand.u32 %v606, 4294901760
    %v1060 = vsub.f32 %v606, %v1059
    %v1061 = vand.u32 %v1060, 4294901760
    %1062 = vmatpush.msra.mxu0 %v1061
    %v1063 = vand.u32 %v451, 4294901760
    %v1064 = vsub.f32 %v451, %v1063
    %v1065 = vand.u32 %v1064, 4294901760
    %1066 = vmatpush.msra.mxu0 %v1065
    %v1067 = vand.u32 %v296, 4294901760
    %v1068 = vsub.f32 %v296, %v1067
    %v1069 = vand.u32 %v1068, 4294901760
    %1070 = vmatpush.msra.mxu0 %v1069
    %v1071 = vand.u32 %v839, 4294901760
    %1072 = vmatmul.f32.gmra.mxu0 %v1071
    %v1073 = vpop.f32.mrf.mxu0
    %v1074 = vadd.f32 %v1023, %v1073
    %v1075 = vand.u32 %v841, 4294901760
    %1076 = vmatmul.f32.gmra.mxu0 %v1075
    %v1077 = vpop.f32.mrf.mxu0
    %v1078 = vadd.f32 %v1029, %v1077
    %v1079 = vand.u32 %v843, 4294901760
    %1080 = vmatmul.f32.gmra.mxu0 %v1079
    %v1081 = vpop.f32.mrf.mxu0
    %v1082 = vadd.f32 %v1035, %v1081
    %v1083 = vand.u32 %v845, 4294901760
    %1084 = vmatmul.f32.gmra.mxu0 %v1083
    %v1085 = vpop.f32.mrf.mxu0
    %v1086 = vadd.f32 %v1041, %v1085
    %1087 = vdwg.mxu0
    %1088 = vmatpush.msra.mxu0 0.0
    %1089 = vmatpush.msra.mxu0 0.0
    %1090 = vmatpush.msra.mxu0 0.0
    %1091 = vmatpush.msra.mxu0 0.0
    %1092 = vmatpush.msra.mxu0 0.0
    %1093 = vmatpush.msra.mxu0 0.0
    %1094 = vmatpush.msra.mxu0 0.0
    %1095 = vmatpush.msra.mxu0 0.0
    %1096 = vmatpush.msra.mxu0 0.0
    %1097 = vmatpush.msra.mxu0 0.0
    %1098 = vmatpush.msra.mxu0 0.0
    %1099 = vmatpush.msra.mxu0 0.0
    %v1100 = vand.u32 %v761, 4294901760
    %1101 = vmatpush.msra.mxu0 %v1100
    %v1102 = vand.u32 %v606, 4294901760
    %1103 = vmatpush.msra.mxu0 %v1102
    %v1104 = vand.u32 %v451, 4294901760
    %1105 = vmatpush.msra.mxu0 %v1104
    %v1106 = vand.u32 %v296, 4294901760
    %1107 = vmatpush.msra.mxu0 %v1106
    %v1108 = vand.u32 %v839, 4294901760
    %1109 = vmatmul.f32.gmra.mxu0 %v1108
    %v1110 = vpop.f32.mrf.mxu0
    %v1111 = vadd.f32 %v1074, %v1110
    %v1112 = vand.u32 %v841, 4294901760
    %1113 = vmatmul.f32.gmra.mxu0 %v1112
    %v1114 = vpop.f32.mrf.mxu0
    %v1115 = vadd.f32 %v1078, %v1114
    %v1116 = vand.u32 %v843, 4294901760
    %1117 = vmatmul.f32.gmra.mxu0 %v1116
    %v1118 = vpop.f32.mrf.mxu0
    %v1119 = vadd.f32 %v1082, %v1118
    %v1120 = vand.u32 %v845, 4294901760
    %1121 = vmatmul.f32.gmra.mxu0 %v1120
    %v1122 = vpop.f32.mrf.mxu0
    %v1123 = vadd.f32 %v1086, %v1122
    %1124 = vdwg.mxu0
    %1125 = vset.pattern.permute.xlu0 39
    %1126 = vperm.xlu0 %1125, %v42
    %v1127 = vpop.permute.xlu0 %1126
    %1129 = vset.pattern.permute.xlu0 39
    %1130 = vperm.xlu0 %1129, %v43
    %v1131 = vpop.permute.xlu0 %1130
    %1133 = vset.pattern.permute.xlu0 39
    %1134 = vperm.xlu0 %1133, %v44
    %v1135 = vpop.permute.xlu0 %1134
    %1137 = vset.pattern.permute.xlu0 39
    %1138 = vperm.xlu0 %1137, %v45
    %v1139 = vpop.permute.xlu0 %1138
    %v1141 = vadd.f32 %v1111, %v1127
    %v1142 = vadd.f32 %v1115, %v1131
    %v1143 = vadd.f32 %v1119, %v1135
    %v1144 = vadd.f32 %v1123, %v1139
    %v1145 = vand.u32 2147483647, %v1141
    %vm1146 = vcmp.le.f32.partialorder %v1145, 0.7853982
    %vm1147 = vcmp.lt.s32.totalorder %v1141, 0
    %v1148 = vand.u32 %v1141, 2139095040
    %v1149 = vshrl.u32 %v1148, 23
    %v1150 = vsub.s32 %v1149, 127
    %v1151 = vand.u32 2147483647, %v1141
    %v1152 = vand.u32 %v1151, 8388607
    %v1153 = vor.u32 %v1152, 8388608
    %v1154 = vsub.s32 0, %v1153
    %v1155 = vadd.s32 %v1150, 1
    %vm1156 = vcmp.gt.s32.totalorder %v1155, 0
    %v1157 = vsel %vm1156, %v1155, 0
    %v1158 = vshrl.u32 %v1157, 5
    %v1159 = vand.u32 %v1157, 31
    %v1160 = vsub.s32 32, %v1159
    %v1161 = vshrl.u32 683565275, %v1160
    %v1162 = vshll.u32 683565275, %v1159
    %v1163 = vshrl.u32 2475754826, %v1160
    %v1164 = vor.u32 %v1162, %v1163
    %v1165 = vshll.u32 2475754826, %v1159
    %v1166 = vshrl.u32 2131351028, %v1160
    %v1167 = vor.u32 %v1165, %v1166
    %v1168 = vshll.u32 2131351028, %v1159
    %v1169 = vshrl.u32 2102212464, %v1160
    %v1170 = vor.u32 %v1168, %v1169
    %v1171 = vshll.u32 2102212464, %v1159
    %v1172 = vshrl.u32 920167782, %v1160
    %v1173 = vor.u32 %v1171, %v1172
    %v1174 = vshll.u32 920167782, %v1159
    %v1175 = vshrl.u32 1326507024, %v1160
    %v1176 = vor.u32 %v1174, %v1175
    %vm1177 = vcmp.lt.s32.totalorder %v1158, 1
    %vm1178 = vcmp.lt.s32.totalorder %v1158, 2
    %vm1179 = vcmp.lt.s32.totalorder %v1158, 3
    %vm1180 = vcmp.lt.s32.totalorder %v1158, 4
    %v1181 = vsel %vm1177, %v1161, %v1164
    %v1182 = vsel %vm1180, %v1170, 2102212464
    %v1183 = vsel %vm1179, %v1167, %v1182
    %v1184 = vsel %vm1178, %v1181, %v1183
    %v1185 = vsel %vm1177, %v1164, %v1167
    %v1186 = vsel %vm1180, %v1173, 920167782
    %v1187 = vsel %vm1179, %v1170, %v1186
    %v1188 = vsel %vm1178, %v1185, %v1187
    %v1189 = vsel %vm1177, %v1167, %v1170
    %v1190 = vsel %vm1180, %v1176, 1326507024
    %v1191 = vsel %vm1179, %v1173, %v1190
    %v1192 = vsel %vm1178, %v1189, %v1191
    %v1193 = vshll.u32 %v1153, 8
    %v1194 = vand.u32 %v1193, 65535
    %v1195 = vshrl.u32 %v1193, 16
    %v1196 = vand.u32 %v1192, 65535
    %v1197 = vshrl.u32 %v1192, 16
    %v1198 = vmul.u32 %v1194, %v1196
    %v1199 = vmul.u32 %v1194, %v1197
    %v1200 = vmul.u32 %v1195, %v1196
    %v1201 = vmul.u32 %v1195, %v1197
    %v1202 = vshll.u32 %v1199, 16
    %v1203 = vshrl.u32 %v1199, 16
    %v1204 = vshll.u32 %v1200, 16
    %v1205 = vshrl.u32 %v1200, 16
    %vm1206 = vc.u32 %v1198, %v1202
    %v1207 = vsel %vm1206, 1, 0
    %v1208 = vadd.s32 %v1198, %v1202
    %v1209 = vadd.s32 %v1201, %v1207
    %vm1210 = vc.u32 %v1208, %v1204
    %v1211 = vsel %vm1210, 1, 0
    %v1212 = vadd.s32 %v1208, %v1204
    %v1213 = vadd.s32 %v1209, %v1211
    %v1214 = vadd.s32 %v1213, %v1203
    %v1215 = vadd.s32 %v1214, %v1205
    %v1216 = vand.u32 %v1193, 65535
    %v1217 = vshrl.u32 %v1193, 16
    %v1218 = vand.u32 %v1188, 65535
    %v1219 = vshrl.u32 %v1188, 16
    %v1220 = vmul.u32 %v1216, %v1218
    %v1221 = vmul.u32 %v1216, %v1219
    %v1222 = vmul.u32 %v1217, %v1218
    %v1223 = vmul.u32 %v1217, %v1219
    %v1224 = vshll.u32 %v1221, 16
    %v1225 = vshrl.u32 %v1221, 16
    %v1226 = vshll.u32 %v1222, 16
    %v1227 = vshrl.u32 %v1222, 16
    %vm1228 = vc.u32 %v1220, %v1224
    %v1229 = vsel %vm1228, 1, 0
    %v1230 = vadd.s32 %v1220, %v1224
    %v1231 = vadd.s32 %v1223, %v1229
    %vm1232 = vc.u32 %v1230, %v1226
    %v1233 = vsel %vm1232, 1, 0
    %v1234 = vadd.s32 %v1230, %v1226
    %v1235 = vadd.s32 %v1231, %v1233
    %v1236 = vadd.s32 %v1235, %v1225
    %v1237 = vadd.s32 %v1236, %v1227
    %v1238 = vmul.u32 %v1193, %v1184
    %v1239 = vadd.s32 %v1215, %v1234
    %vm1240 = vc.u32 %v1215, %v1234
    %v1241 = vadd.s32 %v1237, 1
    %v1242 = vsel %vm1240, %v1241, %v1237
    %v1243 = vadd.s32 %v1238, %v1242
    %v1244 = vadd.s32 %v1243, 536870912
    %v1245 = vshrl.u32 %v1244, 30
    %v1246 = vshll.u32 %v1245, 30
    %v1247 = vsub.s32 %v1243, %v1246
    %vm1248 = vcmp.lt.s32.totalorder %v1247, 0
    %v1249 = vsub.s32 0, %v1247
    %v1250 = vsel %vm1248, %v1249, %v1247
    %v1251 = vclz %v1250
    %v1252 = vsub.s32 %v1251, 2
    %vm1253 = vcmp.gt.s32.totalorder 0, %v1252
    %v1254 = vsel %vm1253, 0, %v1252
    %v1255 = vsub.s32 32, %v1254
    %v1256 = vshll.u32 %v1247, %v1254
    %v1257 = vshrl.u32 %v1239, %v1255
    %v1258 = vor.u32 %v1256, %v1257
    %v1259 = vsub.s32 4294967266, %v1254
    %v1260 = vadd.s32 %v1259, 127
    %v1261 = vshll.u32 %v1260, 23
    %v1262 = vor.u32 4788187, %v1261
    %v1263 = vand.u32 2147483647, %v1262
    %v1265 = vcvt.s32.f32 %v1258
    %v1266 = vmul.f32 %v1265, %v1263
    %v1267 = vxor.u32 %v1266, 2147483648
    %v1268 = vsel %vm1147, %v1267, %v1266
    %v1269 = vsub.s32 4, %v1245
    %v1270 = vsel %vm1147, %v1269, %v1245
    %v1271 = vsel %vm1146, %v1141, %v1268
    %v1272 = vsel %vm1146, 0, %v1270
    %v1273 = vmul.f32 %v1271, %v1271
    %v1274 = vmul.f32 %v1273, -0.001358992
    %v1275 = vadd.f32 %v1274, 0.041655596
    %v1276 = vmul.f32 %v1273, %v1275
    %v1277 = vadd.f32 %v1276, -0.4999988
    %v1278 = vmul.f32 %v1273, %v1277
    %v1279 = vadd.f32 1.0, %v1278
    %v1280 = vmul.f32 %v1271, %v1271
    %v1281 = vmul.f32 %v1280, -0.00019511016
    %v1282 = vadd.f32 %v1281, 0.008332121
    %v1283 = vmul.f32 %v1280, %v1282
    %v1284 = vadd.f32 %v1283, -0.16666654
    %v1285 = vmul.f32 %v1280, %v1284
    %v1286 = vadd.f32 %v1285, 1.0
    %v1287 = vmul.f32 %v1286, %v1271
    %vm1288 = vweird.f32 %v1141
    %v1289 = vadd.s32 %v1272, 3
    %v1290 = vand.u32 %v1289, 3
    %vm1291 = vcmp.lt.s32.totalorder %v1290, 2
    %vm1292 = vcmp.eq.s32.totalorder %v1290, 0
    %v1293 = vxor.u32 %v1287, 2147483648
    %v1294 = vsel %vm1292, %v1279, %v1293
    %vm1295 = vcmp.eq.s32.totalorder %v1290, 2
    %v1296 = vxor.u32 %v1279, 2147483648
    %v1297 = vsel %vm1295, %v1296, %v1287
    %v1298 = vsel %vm1291, %v1294, %v1297
    %v1299 = vsel %vm1288, nan, %v1298
    %v1300 = vand.u32 2147483647, %v1142
    %vm1301 = vcmp.le.f32.partialorder %v1300, 0.7853982
    %vm1302 = vcmp.lt.s32.totalorder %v1142, 0
    %v1303 = vand.u32 %v1142, 2139095040
    %v1304 = vshrl.u32 %v1303, 23
    %v1305 = vsub.s32 %v1304, 127
    %v1306 = vand.u32 2147483647, %v1142
    %v1307 = vand.u32 %v1306, 8388607
    %v1308 = vor.u32 %v1307, 8388608
    %v1309 = vsub.s32 0, %v1308
    %v1310 = vadd.s32 %v1305, 1
    %vm1311 = vcmp.gt.s32.totalorder %v1310, 0
    %v1312 = vsel %vm1311, %v1310, 0
    %v1313 = vshrl.u32 %v1312, 5
    %v1314 = vand.u32 %v1312, 31
    %v1315 = vsub.s32 32, %v1314
    %v1316 = vshrl.u32 683565275, %v1315
    %v1317 = vshll.u32 683565275, %v1314
    %v1318 = vshrl.u32 2475754826, %v1315
    %v1319 = vor.u32 %v1317, %v1318
    %v1320 = vshll.u32 2475754826, %v1314
    %v1321 = vshrl.u32 2131351028, %v1315
    %v1322 = vor.u32 %v1320, %v1321
    %v1323 = vshll.u32 2131351028, %v1314
    %v1324 = vshrl.u32 2102212464, %v1315
    %v1325 = vor.u32 %v1323, %v1324
    %v1326 = vshll.u32 2102212464, %v1314
    %v1327 = vshrl.u32 920167782, %v1315
    %v1328 = vor.u32 %v1326, %v1327
    %v1329 = vshll.u32 920167782, %v1314
    %v1330 = vshrl.u32 1326507024, %v1315
    %v1331 = vor.u32 %v1329, %v1330
    %vm1332 = vcmp.lt.s32.totalorder %v1313, 1
    %vm1333 = vcmp.lt.s32.totalorder %v1313, 2
    %vm1334 = vcmp.lt.s32.totalorder %v1313, 3
    %vm1335 = vcmp.lt.s32.totalorder %v1313, 4
    %v1336 = vsel %vm1332, %v1316, %v1319
    %v1337 = vsel %vm1335, %v1325, 2102212464
    %v1338 = vsel %vm1334, %v1322, %v1337
    %v1339 = vsel %vm1333, %v1336, %v1338
    %v1340 = vsel %vm1332, %v1319, %v1322
    %v1341 = vsel %vm1335, %v1328, 920167782
    %v1342 = vsel %vm1334, %v1325, %v1341
    %v1343 = vsel %vm1333, %v1340, %v1342
    %v1344 = vsel %vm1332, %v1322, %v1325
    %v1345 = vsel %vm1335, %v1331, 1326507024
    %v1346 = vsel %vm1334, %v1328, %v1345
    %v1347 = vsel %vm1333, %v1344, %v1346
    %v1348 = vshll.u32 %v1308, 8
    %v1349 = vand.u32 %v1348, 65535
    %v1350 = vshrl.u32 %v1348, 16
    %v1351 = vand.u32 %v1347, 65535
    %v1352 = vshrl.u32 %v1347, 16
    %v1353 = vmul.u32 %v1349, %v1351
    %v1354 = vmul.u32 %v1349, %v1352
    %v1355 = vmul.u32 %v1350, %v1351
    %v1356 = vmul.u32 %v1350, %v1352
    %v1357 = vshll.u32 %v1354, 16
    %v1358 = vshrl.u32 %v1354, 16
    %v1359 = vshll.u32 %v1355, 16
    %v1360 = vshrl.u32 %v1355, 16
    %vm1361 = vc.u32 %v1353, %v1357
    %v1362 = vsel %vm1361, 1, 0
    %v1363 = vadd.s32 %v1353, %v1357
    %v1364 = vadd.s32 %v1356, %v1362
    %vm1365 = vc.u32 %v1363, %v1359
    %v1366 = vsel %vm1365, 1, 0
    %v1367 = vadd.s32 %v1363, %v1359
    %v1368 = vadd.s32 %v1364, %v1366
    %v1369 = vadd.s32 %v1368, %v1358
    %v1370 = vadd.s32 %v1369, %v1360
    %v1371 = vand.u32 %v1348, 65535
    %v1372 = vshrl.u32 %v1348, 16
    %v1373 = vand.u32 %v1343, 65535
    %v1374 = vshrl.u32 %v1343, 16
    %v1375 = vmul.u32 %v1371, %v1373
    %v1376 = vmul.u32 %v1371, %v1374
    %v1377 = vmul.u32 %v1372, %v1373
    %v1378 = vmul.u32 %v1372, %v1374
    %v1379 = vshll.u32 %v1376, 16
    %v1380 = vshrl.u32 %v1376, 16
    %v1381 = vshll.u32 %v1377, 16
    %v1382 = vshrl.u32 %v1377, 16
    %vm1383 = vc.u32 %v1375, %v1379
    %v1384 = vsel %vm1383, 1, 0
    %v1385 = vadd.s32 %v1375, %v1379
    %v1386 = vadd.s32 %v1378, %v1384
    %vm1387 = vc.u32 %v1385, %v1381
    %v1388 = vsel %vm1387, 1, 0
    %v1389 = vadd.s32 %v1385, %v1381
    %v1390 = vadd.s32 %v1386, %v1388
    %v1391 = vadd.s32 %v1390, %v1380
    %v1392 = vadd.s32 %v1391, %v1382
    %v1393 = vmul.u32 %v1348, %v1339
    %v1394 = vadd.s32 %v1370, %v1389
    %vm1395 = vc.u32 %v1370, %v1389
    %v1396 = vadd.s32 %v1392, 1
    %v1397 = vsel %vm1395, %v1396, %v1392
    %v1398 = vadd.s32 %v1393, %v1397
    %v1399 = vadd.s32 %v1398, 536870912
    %v1400 = vshrl.u32 %v1399, 30
    %v1401 = vshll.u32 %v1400, 30
    %v1402 = vsub.s32 %v1398, %v1401
    %vm1403 = vcmp.lt.s32.totalorder %v1402, 0
    %v1404 = vsub.s32 0, %v1402
    %v1405 = vsel %vm1403, %v1404, %v1402
    %v1406 = vclz %v1405
    %v1407 = vsub.s32 %v1406, 2
    %vm1408 = vcmp.gt.s32.totalorder 0, %v1407
    %v1409 = vsel %vm1408, 0, %v1407
    %v1410 = vsub.s32 32, %v1409
    %v1411 = vshll.u32 %v1402, %v1409
    %v1412 = vshrl.u32 %v1394, %v1410
    %v1413 = vor.u32 %v1411, %v1412
    %v1414 = vsub.s32 4294967266, %v1409
    %v1415 = vadd.s32 %v1414, 127
    %v1416 = vshll.u32 %v1415, 23
    %v1417 = vor.u32 4788187, %v1416
    %v1418 = vand.u32 2147483647, %v1417
    %v1420 = vcvt.s32.f32 %v1413
    %v1421 = vmul.f32 %v1420, %v1418
    %v1422 = vxor.u32 %v1421, 2147483648
    %v1423 = vsel %vm1302, %v1422, %v1421
    %v1424 = vsub.s32 4, %v1400
    %v1425 = vsel %vm1302, %v1424, %v1400
    %v1426 = vsel %vm1301, %v1142, %v1423
    %v1427 = vsel %vm1301, 0, %v1425
    %v1428 = vmul.f32 %v1426, %v1426
    %v1429 = vmul.f32 %v1428, -0.001358992
    %v1430 = vadd.f32 %v1429, 0.041655596
    %v1431 = vmul.f32 %v1428, %v1430
    %v1432 = vadd.f32 %v1431, -0.4999988
    %v1433 = vmul.f32 %v1428, %v1432
    %v1434 = vadd.f32 1.0, %v1433
    %v1435 = vmul.f32 %v1426, %v1426
    %v1436 = vmul.f32 %v1435, -0.00019511016
    %v1437 = vadd.f32 %v1436, 0.008332121
    %v1438 = vmul.f32 %v1435, %v1437
    %v1439 = vadd.f32 %v1438, -0.16666654
    %v1440 = vmul.f32 %v1435, %v1439
    %v1441 = vadd.f32 %v1440, 1.0
    %v1442 = vmul.f32 %v1441, %v1426
    %vm1443 = vweird.f32 %v1142
    %v1444 = vadd.s32 %v1427, 3
    %v1445 = vand.u32 %v1444, 3
    %vm1446 = vcmp.lt.s32.totalorder %v1445, 2
    %vm1447 = vcmp.eq.s32.totalorder %v1445, 0
    %v1448 = vxor.u32 %v1442, 2147483648
    %v1449 = vsel %vm1447, %v1434, %v1448
    %vm1450 = vcmp.eq.s32.totalorder %v1445, 2
    %v1451 = vxor.u32 %v1434, 2147483648
    %v1452 = vsel %vm1450, %v1451, %v1442
    %v1453 = vsel %vm1446, %v1449, %v1452
    %v1454 = vsel %vm1443, nan, %v1453
    %v1455 = vand.u32 2147483647, %v1143
    %vm1456 = vcmp.le.f32.partialorder %v1455, 0.7853982
    %vm1457 = vcmp.lt.s32.totalorder %v1143, 0
    %v1458 = vand.u32 %v1143, 2139095040
    %v1459 = vshrl.u32 %v1458, 23
    %v1460 = vsub.s32 %v1459, 127
    %v1461 = vand.u32 2147483647, %v1143
    %v1462 = vand.u32 %v1461, 8388607
    %v1463 = vor.u32 %v1462, 8388608
    %v1464 = vsub.s32 0, %v1463
    %v1465 = vadd.s32 %v1460, 1
    %vm1466 = vcmp.gt.s32.totalorder %v1465, 0
    %v1467 = vsel %vm1466, %v1465, 0
    %v1468 = vshrl.u32 %v1467, 5
    %v1469 = vand.u32 %v1467, 31
    %v1470 = vsub.s32 32, %v1469
    %v1471 = vshrl.u32 683565275, %v1470
    %v1472 = vshll.u32 683565275, %v1469
    %v1473 = vshrl.u32 2475754826, %v1470
    %v1474 = vor.u32 %v1472, %v1473
    %v1475 = vshll.u32 2475754826, %v1469
    %v1476 = vshrl.u32 2131351028, %v1470
    %v1477 = vor.u32 %v1475, %v1476
    %v1478 = vshll.u32 2131351028, %v1469
    %v1479 = vshrl.u32 2102212464, %v1470
    %v1480 = vor.u32 %v1478, %v1479
    %v1481 = vshll.u32 2102212464, %v1469
    %v1482 = vshrl.u32 920167782, %v1470
    %v1483 = vor.u32 %v1481, %v1482
    %v1484 = vshll.u32 920167782, %v1469
    %v1485 = vshrl.u32 1326507024, %v1470
    %v1486 = vor.u32 %v1484, %v1485
    %vm1487 = vcmp.lt.s32.totalorder %v1468, 1
    %vm1488 = vcmp.lt.s32.totalorder %v1468, 2
    %vm1489 = vcmp.lt.s32.totalorder %v1468, 3
    %vm1490 = vcmp.lt.s32.totalorder %v1468, 4
    %v1491 = vsel %vm1487, %v1471, %v1474
    %v1492 = vsel %vm1490, %v1480, 2102212464
    %v1493 = vsel %vm1489, %v1477, %v1492
    %v1494 = vsel %vm1488, %v1491, %v1493
    %v1495 = vsel %vm1487, %v1474, %v1477
    %v1496 = vsel %vm1490, %v1483, 920167782
    %v1497 = vsel %vm1489, %v1480, %v1496
    %v1498 = vsel %vm1488, %v1495, %v1497
    %v1499 = vsel %vm1487, %v1477, %v1480
    %v1500 = vsel %vm1490, %v1486, 1326507024
    %v1501 = vsel %vm1489, %v1483, %v1500
    %v1502 = vsel %vm1488, %v1499, %v1501
    %v1503 = vshll.u32 %v1463, 8
    %v1504 = vand.u32 %v1503, 65535
    %v1505 = vshrl.u32 %v1503, 16
    %v1506 = vand.u32 %v1502, 65535
    %v1507 = vshrl.u32 %v1502, 16
    %v1508 = vmul.u32 %v1504, %v1506
    %v1509 = vmul.u32 %v1504, %v1507
    %v1510 = vmul.u32 %v1505, %v1506
    %v1511 = vmul.u32 %v1505, %v1507
    %v1512 = vshll.u32 %v1509, 16
    %v1513 = vshrl.u32 %v1509, 16
    %v1514 = vshll.u32 %v1510, 16
    %v1515 = vshrl.u32 %v1510, 16
    %vm1516 = vc.u32 %v1508, %v1512
    %v1517 = vsel %vm1516, 1, 0
    %v1518 = vadd.s32 %v1508, %v1512
    %v1519 = vadd.s32 %v1511, %v1517
    %vm1520 = vc.u32 %v1518, %v1514
    %v1521 = vsel %vm1520, 1, 0
    %v1522 = vadd.s32 %v1518, %v1514
    %v1523 = vadd.s32 %v1519, %v1521
    %v1524 = vadd.s32 %v1523, %v1513
    %v1525 = vadd.s32 %v1524, %v1515
    %v1526 = vand.u32 %v1503, 65535
    %v1527 = vshrl.u32 %v1503, 16
    %v1528 = vand.u32 %v1498, 65535
    %v1529 = vshrl.u32 %v1498, 16
    %v1530 = vmul.u32 %v1526, %v1528
    %v1531 = vmul.u32 %v1526, %v1529
    %v1532 = vmul.u32 %v1527, %v1528
    %v1533 = vmul.u32 %v1527, %v1529
    %v1534 = vshll.u32 %v1531, 16
    %v1535 = vshrl.u32 %v1531, 16
    %v1536 = vshll.u32 %v1532, 16
    %v1537 = vshrl.u32 %v1532, 16
    %vm1538 = vc.u32 %v1530, %v1534
    %v1539 = vsel %vm1538, 1, 0
    %v1540 = vadd.s32 %v1530, %v1534
    %v1541 = vadd.s32 %v1533, %v1539
    %vm1542 = vc.u32 %v1540, %v1536
    %v1543 = vsel %vm1542, 1, 0
    %v1544 = vadd.s32 %v1540, %v1536
    %v1545 = vadd.s32 %v1541, %v1543
    %v1546 = vadd.s32 %v1545, %v1535
    %v1547 = vadd.s32 %v1546, %v1537
    %v1548 = vmul.u32 %v1503, %v1494
    %v1549 = vadd.s32 %v1525, %v1544
    %vm1550 = vc.u32 %v1525, %v1544
    %v1551 = vadd.s32 %v1547, 1
    %v1552 = vsel %vm1550, %v1551, %v1547
    %v1553 = vadd.s32 %v1548, %v1552
    %v1554 = vadd.s32 %v1553, 536870912
    %v1555 = vshrl.u32 %v1554, 30
    %v1556 = vshll.u32 %v1555, 30
    %v1557 = vsub.s32 %v1553, %v1556
    %vm1558 = vcmp.lt.s32.totalorder %v1557, 0
    %v1559 = vsub.s32 0, %v1557
    %v1560 = vsel %vm1558, %v1559, %v1557
    %v1561 = vclz %v1560
    %v1562 = vsub.s32 %v1561, 2
    %vm1563 = vcmp.gt.s32.totalorder 0, %v1562
    %v1564 = vsel %vm1563, 0, %v1562
    %v1565 = vsub.s32 32, %v1564
    %v1566 = vshll.u32 %v1557, %v1564
    %v1567 = vshrl.u32 %v1549, %v1565
    %v1568 = vor.u32 %v1566, %v1567
    %v1569 = vsub.s32 4294967266, %v1564
    %v1570 = vadd.s32 %v1569, 127
    %v1571 = vshll.u32 %v1570, 23
    %v1572 = vor.u32 4788187, %v1571
    %v1573 = vand.u32 2147483647, %v1572
    %v1575 = vcvt.s32.f32 %v1568
    %v1576 = vmul.f32 %v1575, %v1573
    %v1577 = vxor.u32 %v1576, 2147483648
    %v1578 = vsel %vm1457, %v1577, %v1576
    %v1579 = vsub.s32 4, %v1555
    %v1580 = vsel %vm1457, %v1579, %v1555
    %v1581 = vsel %vm1456, %v1143, %v1578
    %v1582 = vsel %vm1456, 0, %v1580
    %v1583 = vmul.f32 %v1581, %v1581
    %v1584 = vmul.f32 %v1583, -0.001358992
    %v1585 = vadd.f32 %v1584, 0.041655596
    %v1586 = vmul.f32 %v1583, %v1585
    %v1587 = vadd.f32 %v1586, -0.4999988
    %v1588 = vmul.f32 %v1583, %v1587
    %v1589 = vadd.f32 1.0, %v1588
    %v1590 = vmul.f32 %v1581, %v1581
    %v1591 = vmul.f32 %v1590, -0.00019511016
    %v1592 = vadd.f32 %v1591, 0.008332121
    %v1593 = vmul.f32 %v1590, %v1592
    %v1594 = vadd.f32 %v1593, -0.16666654
    %v1595 = vmul.f32 %v1590, %v1594
    %v1596 = vadd.f32 %v1595, 1.0
    %v1597 = vmul.f32 %v1596, %v1581
    %vm1598 = vweird.f32 %v1143
    %v1599 = vadd.s32 %v1582, 3
    %v1600 = vand.u32 %v1599, 3
    %vm1601 = vcmp.lt.s32.totalorder %v1600, 2
    %vm1602 = vcmp.eq.s32.totalorder %v1600, 0
    %v1603 = vxor.u32 %v1597, 2147483648
    %v1604 = vsel %vm1602, %v1589, %v1603
    %vm1605 = vcmp.eq.s32.totalorder %v1600, 2
    %v1606 = vxor.u32 %v1589, 2147483648
    %v1607 = vsel %vm1605, %v1606, %v1597
    %v1608 = vsel %vm1601, %v1604, %v1607
    %v1609 = vsel %vm1598, nan, %v1608
    %v1610 = vand.u32 2147483647, %v1144
    %vm1611 = vcmp.le.f32.partialorder %v1610, 0.7853982
    %vm1612 = vcmp.lt.s32.totalorder %v1144, 0
    %v1613 = vand.u32 %v1144, 2139095040
    %v1614 = vshrl.u32 %v1613, 23
    %v1615 = vsub.s32 %v1614, 127
    %v1616 = vand.u32 2147483647, %v1144
    %v1617 = vand.u32 %v1616, 8388607
    %v1618 = vor.u32 %v1617, 8388608
    %v1619 = vsub.s32 0, %v1618
    %v1620 = vadd.s32 %v1615, 1
    %vm1621 = vcmp.gt.s32.totalorder %v1620, 0
    %v1622 = vsel %vm1621, %v1620, 0
    %v1623 = vshrl.u32 %v1622, 5
    %v1624 = vand.u32 %v1622, 31
    %v1625 = vsub.s32 32, %v1624
    %v1626 = vshrl.u32 683565275, %v1625
    %v1627 = vshll.u32 683565275, %v1624
    %v1628 = vshrl.u32 2475754826, %v1625
    %v1629 = vor.u32 %v1627, %v1628
    %v1630 = vshll.u32 2475754826, %v1624
    %v1631 = vshrl.u32 2131351028, %v1625
    %v1632 = vor.u32 %v1630, %v1631
    %v1633 = vshll.u32 2131351028, %v1624
    %v1634 = vshrl.u32 2102212464, %v1625
    %v1635 = vor.u32 %v1633, %v1634
    %v1636 = vshll.u32 2102212464, %v1624
    %v1637 = vshrl.u32 920167782, %v1625
    %v1638 = vor.u32 %v1636, %v1637
    %v1639 = vshll.u32 920167782, %v1624
    %v1640 = vshrl.u32 1326507024, %v1625
    %v1641 = vor.u32 %v1639, %v1640
    %vm1642 = vcmp.lt.s32.totalorder %v1623, 1
    %vm1643 = vcmp.lt.s32.totalorder %v1623, 2
    %vm1644 = vcmp.lt.s32.totalorder %v1623, 3
    %vm1645 = vcmp.lt.s32.totalorder %v1623, 4
    %v1646 = vsel %vm1642, %v1626, %v1629
    %v1647 = vsel %vm1645, %v1635, 2102212464
    %v1648 = vsel %vm1644, %v1632, %v1647
    %v1649 = vsel %vm1643, %v1646, %v1648
    %v1650 = vsel %vm1642, %v1629, %v1632
    %v1651 = vsel %vm1645, %v1638, 920167782
    %v1652 = vsel %vm1644, %v1635, %v1651
    %v1653 = vsel %vm1643, %v1650, %v1652
    %v1654 = vsel %vm1642, %v1632, %v1635
    %v1655 = vsel %vm1645, %v1641, 1326507024
    %v1656 = vsel %vm1644, %v1638, %v1655
    %v1657 = vsel %vm1643, %v1654, %v1656
    %v1658 = vshll.u32 %v1618, 8
    %v1659 = vand.u32 %v1658, 65535
    %v1660 = vshrl.u32 %v1658, 16
    %v1661 = vand.u32 %v1657, 65535
    %v1662 = vshrl.u32 %v1657, 16
    %v1663 = vmul.u32 %v1659, %v1661
    %v1664 = vmul.u32 %v1659, %v1662
    %v1665 = vmul.u32 %v1660, %v1661
    %v1666 = vmul.u32 %v1660, %v1662
    %v1667 = vshll.u32 %v1664, 16
    %v1668 = vshrl.u32 %v1664, 16
    %v1669 = vshll.u32 %v1665, 16
    %v1670 = vshrl.u32 %v1665, 16
    %vm1671 = vc.u32 %v1663, %v1667
    %v1672 = vsel %vm1671, 1, 0
    %v1673 = vadd.s32 %v1663, %v1667
    %v1674 = vadd.s32 %v1666, %v1672
    %vm1675 = vc.u32 %v1673, %v1669
    %v1676 = vsel %vm1675, 1, 0
    %v1677 = vadd.s32 %v1673, %v1669
    %v1678 = vadd.s32 %v1674, %v1676
    %v1679 = vadd.s32 %v1678, %v1668
    %v1680 = vadd.s32 %v1679, %v1670
    %v1681 = vand.u32 %v1658, 65535
    %v1682 = vshrl.u32 %v1658, 16
    %v1683 = vand.u32 %v1653, 65535
    %v1684 = vshrl.u32 %v1653, 16
    %v1685 = vmul.u32 %v1681, %v1683
    %v1686 = vmul.u32 %v1681, %v1684
    %v1687 = vmul.u32 %v1682, %v1683
    %v1688 = vmul.u32 %v1682, %v1684
    %v1689 = vshll.u32 %v1686, 16
    %v1690 = vshrl.u32 %v1686, 16
    %v1691 = vshll.u32 %v1687, 16
    %v1692 = vshrl.u32 %v1687, 16
    %vm1693 = vc.u32 %v1685, %v1689
    %v1694 = vsel %vm1693, 1, 0
    %v1695 = vadd.s32 %v1685, %v1689
    %v1696 = vadd.s32 %v1688, %v1694
    %vm1697 = vc.u32 %v1695, %v1691
    %v1698 = vsel %vm1697, 1, 0
    %v1699 = vadd.s32 %v1695, %v1691
    %v1700 = vadd.s32 %v1696, %v1698
    %v1701 = vadd.s32 %v1700, %v1690
    %v1702 = vadd.s32 %v1701, %v1692
    %v1703 = vmul.u32 %v1658, %v1649
    %v1704 = vadd.s32 %v1680, %v1699
    %vm1705 = vc.u32 %v1680, %v1699
    %v1706 = vadd.s32 %v1702, 1
    %v1707 = vsel %vm1705, %v1706, %v1702
    %v1708 = vadd.s32 %v1703, %v1707
    %v1709 = vadd.s32 %v1708, 536870912
    %v1710 = vshrl.u32 %v1709, 30
    %v1711 = vshll.u32 %v1710, 30
    %v1712 = vsub.s32 %v1708, %v1711
    %vm1713 = vcmp.lt.s32.totalorder %v1712, 0
    %v1714 = vsub.s32 0, %v1712
    %v1715 = vsel %vm1713, %v1714, %v1712
    %v1716 = vclz %v1715
    %v1717 = vsub.s32 %v1716, 2
    %vm1718 = vcmp.gt.s32.totalorder 0, %v1717
    %v1719 = vsel %vm1718, 0, %v1717
    %v1720 = vsub.s32 32, %v1719
    %v1721 = vshll.u32 %v1712, %v1719
    %v1722 = vshrl.u32 %v1704, %v1720
    %v1723 = vor.u32 %v1721, %v1722
    %v1724 = vsub.s32 4294967266, %v1719
    %v1725 = vadd.s32 %v1724, 127
    %v1726 = vshll.u32 %v1725, 23
    %v1727 = vor.u32 4788187, %v1726
    %v1728 = vand.u32 2147483647, %v1727
    %v1730 = vcvt.s32.f32 %v1723
    %v1731 = vmul.f32 %v1730, %v1728
    %v1732 = vxor.u32 %v1731, 2147483648
    %v1733 = vsel %vm1612, %v1732, %v1731
    %v1734 = vsub.s32 4, %v1710
    %v1735 = vsel %vm1612, %v1734, %v1710
    %v1736 = vsel %vm1611, %v1144, %v1733
    %v1737 = vsel %vm1611, 0, %v1735
    %v1738 = vmul.f32 %v1736, %v1736
    %v1739 = vmul.f32 %v1738, -0.001358992
    %v1740 = vadd.f32 %v1739, 0.041655596
    %v1741 = vmul.f32 %v1738, %v1740
    %v1742 = vadd.f32 %v1741, -0.4999988
    %v1743 = vmul.f32 %v1738, %v1742
    %v1744 = vadd.f32 1.0, %v1743
    %v1745 = vmul.f32 %v1736, %v1736
    %v1746 = vmul.f32 %v1745, -0.00019511016
    %v1747 = vadd.f32 %v1746, 0.008332121
    %v1748 = vmul.f32 %v1745, %v1747
    %v1749 = vadd.f32 %v1748, -0.16666654
    %v1750 = vmul.f32 %v1745, %v1749
    %v1751 = vadd.f32 %v1750, 1.0
    %v1752 = vmul.f32 %v1751, %v1736
    %vm1753 = vweird.f32 %v1144
    %v1754 = vadd.s32 %v1737, 3
    %v1755 = vand.u32 %v1754, 3
    %vm1756 = vcmp.lt.s32.totalorder %v1755, 2
    %vm1757 = vcmp.eq.s32.totalorder %v1755, 0
    %v1758 = vxor.u32 %v1752, 2147483648
    %v1759 = vsel %vm1757, %v1744, %v1758
    %vm1760 = vcmp.eq.s32.totalorder %v1755, 2
    %v1761 = vxor.u32 %v1744, 2147483648
    %v1762 = vsel %vm1760, %v1761, %v1752
    %v1763 = vsel %vm1756, %v1759, %v1762
    %v1764 = vsel %vm1753, nan, %v1763
    %1765 = vset.pattern.permute.xlu0 72
    %1766 = vperm.xlu0 %1765, %v42
    %v1767 = vpop.permute.xlu0 %1766
    %1769 = vset.pattern.permute.xlu0 72
    %1770 = vperm.xlu0 %1769, %v43
    %v1771 = vpop.permute.xlu0 %1770
    %1773 = vset.pattern.permute.xlu0 72
    %1774 = vperm.xlu0 %1773, %v44
    %v1775 = vpop.permute.xlu0 %1774
    %1777 = vset.pattern.permute.xlu0 72
    %1778 = vperm.xlu0 %1777, %v45
    %v1779 = vpop.permute.xlu0 %1778
    %1781 = vrot.lane.b32.xlu0 %v42, 88
    %v1782 = vpop.permute.xlu0 %1781
    %1783 = vrot.lane.b32.xlu0 %v43, 88
    %v1784 = vpop.permute.xlu0 %1783
    %1785 = vrot.lane.b32.xlu0 %v44, 88
    %v1786 = vpop.permute.xlu0 %1785
    %1787 = vrot.lane.b32.xlu0 %v45, 88
    %v1788 = vpop.permute.xlu0 %1787
    %v1789 = vsel %vm838, %v1782, 0
    %v1791 = vsel %vm838, %v1784, 0
    %v1793 = vsel %vm838, %v1786, 0
    %v1795 = vsel %vm838, %v1788, 0
    %1797 = vmatpush.msra.mxu0 0.0
    %1798 = vmatpush.msra.mxu0 0.0
    %1799 = vmatpush.msra.mxu0 0.0
    %1800 = vmatpush.msra.mxu0 0.0
    %1801 = vmatpush.msra.mxu0 0.0
    %1802 = vmatpush.msra.mxu0 0.0
    %1803 = vmatpush.msra.mxu0 0.0
    %1804 = vmatpush.msra.mxu0 0.0
    %1805 = vmatpush.msra.mxu0 0.0
    %1806 = vmatpush.msra.mxu0 0.0
    %1807 = vmatpush.msra.mxu0 0.0
    %1808 = vmatpush.msra.mxu0 0.0
    %v1809 = vand.u32 %v1764, 4294901760
    %1810 = vmatpush.msra.mxu0 %v1809
    %v1811 = vand.u32 %v1609, 4294901760
    %1812 = vmatpush.msra.mxu0 %v1811
    %v1813 = vand.u32 %v1454, 4294901760
    %1814 = vmatpush.msra.mxu0 %v1813
    %v1815 = vand.u32 %v1299, 4294901760
    %1816 = vmatpush.msra.mxu0 %v1815
    %v1817 = vand.u32 %v1789, 4294901760
    %v1818 = vsub.f32 %v1789, %v1817
    %v1819 = vand.u32 %v1818, 4294901760
    %v1820 = vsub.f32 %v1818, %v1819
    %v1821 = vand.u32 %v1820, 4294901760
    %1822 = vmatmul.f32.gmra.mxu0 %v1821
    %v1823 = vpop.f32.mrf.mxu0
    %v1824 = vadd.f32 %v1767, %v1823
    %v1825 = vand.u32 %v1791, 4294901760
    %v1826 = vsub.f32 %v1791, %v1825
    %v1827 = vand.u32 %v1826, 4294901760
    %v1828 = vsub.f32 %v1826, %v1827
    %v1829 = vand.u32 %v1828, 4294901760
    %1830 = vmatmul.f32.gmra.mxu0 %v1829
    %v1831 = vpop.f32.mrf.mxu0
    %v1832 = vadd.f32 %v1771, %v1831
    %v1833 = vand.u32 %v1793, 4294901760
    %v1834 = vsub.f32 %v1793, %v1833
    %v1835 = vand.u32 %v1834, 4294901760
    %v1836 = vsub.f32 %v1834, %v1835
    %v1837 = vand.u32 %v1836, 4294901760
    %1838 = vmatmul.f32.gmra.mxu0 %v1837
    %v1839 = vpop.f32.mrf.mxu0
    %v1840 = vadd.f32 %v1775, %v1839
    %v1841 = vand.u32 %v1795, 4294901760
    %v1842 = vsub.f32 %v1795, %v1841
    %v1843 = vand.u32 %v1842, 4294901760
    %v1844 = vsub.f32 %v1842, %v1843
    %v1845 = vand.u32 %v1844, 4294901760
    %1846 = vmatmul.f32.gmra.mxu0 %v1845
    %v1847 = vpop.f32.mrf.mxu0
    %v1848 = vadd.f32 %v1779, %v1847
    %1849 = vdwg.mxu0
    %1850 = vmatpush.msra.mxu0 0.0
    %1851 = vmatpush.msra.mxu0 0.0
    %1852 = vmatpush.msra.mxu0 0.0
    %1853 = vmatpush.msra.mxu0 0.0
    %1854 = vmatpush.msra.mxu0 0.0
    %1855 = vmatpush.msra.mxu0 0.0
    %1856 = vmatpush.msra.mxu0 0.0
    %1857 = vmatpush.msra.mxu0 0.0
    %1858 = vmatpush.msra.mxu0 0.0
    %1859 = vmatpush.msra.mxu0 0.0
    %1860 = vmatpush.msra.mxu0 0.0
    %1861 = vmatpush.msra.mxu0 0.0
    %v1862 = vand.u32 %v1764, 4294901760
    %v1863 = vsub.f32 %v1764, %v1862
    %v1864 = vand.u32 %v1863, 4294901760
    %v1865 = vsub.f32 %v1863, %v1864
    %v1866 = vand.u32 %v1865, 4294901760
    %1867 = vmatpush.msra.mxu0 %v1866
    %v1868 = vand.u32 %v1609, 4294901760
    %v1869 = vsub.f32 %v1609, %v1868
    %v1870 = vand.u32 %v1869, 4294901760
    %v1871 = vsub.f32 %v1869, %v1870
    %v1872 = vand.u32 %v1871, 4294901760
    %1873 = vmatpush.msra.mxu0 %v1872
    %v1874 = vand.u32 %v1454, 4294901760
    %v1875 = vsub.f32 %v1454, %v1874
    %v1876 = vand.u32 %v1875, 4294901760
    %v1877 = vsub.f32 %v1875, %v1876
    %v1878 = vand.u32 %v1877, 4294901760
    %1879 = vmatpush.msra.mxu0 %v1878
    %v1880 = vand.u32 %v1299, 4294901760
    %v1881 = vsub.f32 %v1299, %v1880
    %v1882 = vand.u32 %v1881, 4294901760
    %v1883 = vsub.f32 %v1881, %v1882
    %v1884 = vand.u32 %v1883, 4294901760
    %1885 = vmatpush.msra.mxu0 %v1884
    %v1886 = vand.u32 %v1789, 4294901760
    %1887 = vmatmul.f32.gmra.mxu0 %v1886
    %v1888 = vpop.f32.mrf.mxu0
    %v1889 = vadd.f32 %v1824, %v1888
    %v1890 = vand.u32 %v1791, 4294901760
    %1891 = vmatmul.f32.gmra.mxu0 %v1890
    %v1892 = vpop.f32.mrf.mxu0
    %v1893 = vadd.f32 %v1832, %v1892
    %v1894 = vand.u32 %v1793, 4294901760
    %1895 = vmatmul.f32.gmra.mxu0 %v1894
    %v1896 = vpop.f32.mrf.mxu0
    %v1897 = vadd.f32 %v1840, %v1896
    %v1898 = vand.u32 %v1795, 4294901760
    %1899 = vmatmul.f32.gmra.mxu0 %v1898
    %v1900 = vpop.f32.mrf.mxu0
    %v1901 = vadd.f32 %v1848, %v1900
    %1902 = vdwg.mxu0
    %1903 = vmatpush.msra.mxu0 0.0
    %1904 = vmatpush.msra.mxu0 0.0
    %1905 = vmatpush.msra.mxu0 0.0
    %1906 = vmatpush.msra.mxu0 0.0
    %1907 = vmatpush.msra.mxu0 0.0
    %1908 = vmatpush.msra.mxu0 0.0
    %1909 = vmatpush.msra.mxu0 0.0
    %1910 = vmatpush.msra.mxu0 0.0
    %1911 = vmatpush.msra.mxu0 0.0
    %1912 = vmatpush.msra.mxu0 0.0
    %1913 = vmatpush.msra.mxu0 0.0
    %1914 = vmatpush.msra.mxu0 0.0
    %v1915 = vand.u32 %v1764, 4294901760
    %v1916 = vsub.f32 %v1764, %v1915
    %1917 = vmatpush.msra.mxu0 %v1916
    %v1918 = vand.u32 %v1609, 4294901760
    %v1919 = vsub.f32 %v1609, %v1918
    %1920 = vmatpush.msra.mxu0 %v1919
    %v1921 = vand.u32 %v1454, 4294901760
    %v1922 = vsub.f32 %v1454, %v1921
    %1923 = vmatpush.msra.mxu0 %v1922
    %v1924 = vand.u32 %v1299, 4294901760
    %v1925 = vsub.f32 %v1299, %v1924
    %1926 = vmatpush.msra.mxu0 %v1925
    %v1927 = vand.u32 %v1789, 4294901760
    %v1928 = vsub.f32 %v1789, %v1927
    %1929 = vmatmul.f32.gmra.mxu0 %v1928
    %v1930 = vpop.f32.mrf.mxu0
    %v1931 = vadd.f32 %v1889, %v1930
    %v1932 = vand.u32 %v1791, 4294901760
    %v1933 = vsub.f32 %v1791, %v1932
    %1934 = vmatmul.f32.gmra.mxu0 %v1933
    %v1935 = vpop.f32.mrf.mxu0
    %v1936 = vadd.f32 %v1893, %v1935
    %v1937 = vand.u32 %v1793, 4294901760
    %v1938 = vsub.f32 %v1793, %v1937
    %1939 = vmatmul.f32.gmra.mxu0 %v1938
    %v1940 = vpop.f32.mrf.mxu0
    %v1941 = vadd.f32 %v1897, %v1940
    %v1942 = vand.u32 %v1795, 4294901760
    %v1943 = vsub.f32 %v1795, %v1942
    %1944 = vmatmul.f32.gmra.mxu0 %v1943
    %v1945 = vpop.f32.mrf.mxu0
    %v1946 = vadd.f32 %v1901, %v1945
    %1947 = vdwg.mxu0
    %1948 = vmatpush.msra.mxu0 0.0
    %1949 = vmatpush.msra.mxu0 0.0
    %1950 = vmatpush.msra.mxu0 0.0
    %1951 = vmatpush.msra.mxu0 0.0
    %1952 = vmatpush.msra.mxu0 0.0
    %1953 = vmatpush.msra.mxu0 0.0
    %1954 = vmatpush.msra.mxu0 0.0
    %1955 = vmatpush.msra.mxu0 0.0
    %1956 = vmatpush.msra.mxu0 0.0
    %1957 = vmatpush.msra.mxu0 0.0
    %1958 = vmatpush.msra.mxu0 0.0
    %1959 = vmatpush.msra.mxu0 0.0
    %v1960 = vand.u32 %v1764, 4294901760
    %1961 = vmatpush.msra.mxu0 %v1960
    %v1962 = vand.u32 %v1609, 4294901760
    %1963 = vmatpush.msra.mxu0 %v1962
    %v1964 = vand.u32 %v1454, 4294901760
    %1965 = vmatpush.msra.mxu0 %v1964
    %v1966 = vand.u32 %v1299, 4294901760
    %1967 = vmatpush.msra.mxu0 %v1966
    %v1968 = vand.u32 %v1789, 4294901760
    %v1969 = vsub.f32 %v1789, %v1968
    %v1970 = vand.u32 %v1969, 4294901760
    %1971 = vmatmul.f32.gmra.mxu0 %v1970
    %v1972 = vpop.f32.mrf.mxu0
    %v1973 = vadd.f32 %v1931, %v1972
    %v1974 = vand.u32 %v1791, 4294901760
    %v1975 = vsub.f32 %v1791, %v1974
    %v1976 = vand.u32 %v1975, 4294901760
    %1977 = vmatmul.f32.gmra.mxu0 %v1976
    %v1978 = vpop.f32.mrf.mxu0
    %v1979 = vadd.f32 %v1936, %v1978
    %v1980 = vand.u32 %v1793, 4294901760
    %v1981 = vsub.f32 %v1793, %v1980
    %v1982 = vand.u32 %v1981, 4294901760
    %1983 = vmatmul.f32.gmra.mxu0 %v1982
    %v1984 = vpop.f32.mrf.mxu0
    %v1985 = vadd.f32 %v1941, %v1984
    %v1986 = vand.u32 %v1795, 4294901760
    %v1987 = vsub.f32 %v1795, %v1986
    %v1988 = vand.u32 %v1987, 4294901760
    %1989 = vmatmul.f32.gmra.mxu0 %v1988
    %v1990 = vpop.f32.mrf.mxu0
    %v1991 = vadd.f32 %v1946, %v1990
    %1992 = vdwg.mxu0
    %1993 = vmatpush.msra.mxu0 0.0
    %1994 = vmatpush.msra.mxu0 0.0
    %1995 = vmatpush.msra.mxu0 0.0
    %1996 = vmatpush.msra.mxu0 0.0
    %1997 = vmatpush.msra.mxu0 0.0
    %1998 = vmatpush.msra.mxu0 0.0
    %1999 = vmatpush.msra.mxu0 0.0
    %2000 = vmatpush.msra.mxu0 0.0
    %2001 = vmatpush.msra.mxu0 0.0
    %2002 = vmatpush.msra.mxu0 0.0
    %2003 = vmatpush.msra.mxu0 0.0
    %2004 = vmatpush.msra.mxu0 0.0
    %v2005 = vand.u32 %v1764, 4294901760
    %v2006 = vsub.f32 %v1764, %v2005
    %v2007 = vand.u32 %v2006, 4294901760
    %2008 = vmatpush.msra.mxu0 %v2007
    %v2009 = vand.u32 %v1609, 4294901760
    %v2010 = vsub.f32 %v1609, %v2009
    %v2011 = vand.u32 %v2010, 4294901760
    %2012 = vmatpush.msra.mxu0 %v2011
    %v2013 = vand.u32 %v1454, 4294901760
    %v2014 = vsub.f32 %v1454, %v2013
    %v2015 = vand.u32 %v2014, 4294901760
    %2016 = vmatpush.msra.mxu0 %v2015
    %v2017 = vand.u32 %v1299, 4294901760
    %v2018 = vsub.f32 %v1299, %v2017
    %v2019 = vand.u32 %v2018, 4294901760
    %2020 = vmatpush.msra.mxu0 %v2019
    %v2021 = vand.u32 %v1789, 4294901760
    %2022 = vmatmul.f32.gmra.mxu0 %v2021
    %v2023 = vpop.f32.mrf.mxu0
    %v2024 = vadd.f32 %v1973, %v2023
    %v2025 = vand.u32 %v1791, 4294901760
    %2026 = vmatmul.f32.gmra.mxu0 %v2025
    %v2027 = vpop.f32.mrf.mxu0
    %v2028 = vadd.f32 %v1979, %v2027
    %v2029 = vand.u32 %v1793, 4294901760
    %2030 = vmatmul.f32.gmra.mxu0 %v2029
    %v2031 = vpop.f32.mrf.mxu0
    %v2032 = vadd.f32 %v1985, %v2031
    %v2033 = vand.u32 %v1795, 4294901760
    %2034 = vmatmul.f32.gmra.mxu0 %v2033
    %v2035 = vpop.f32.mrf.mxu0
    %v2036 = vadd.f32 %v1991, %v2035
    %2037 = vdwg.mxu0
    %2038 = vmatpush.msra.mxu0 0.0
    %2039 = vmatpush.msra.mxu0 0.0
    %2040 = vmatpush.msra.mxu0 0.0
    %2041 = vmatpush.msra.mxu0 0.0
    %2042 = vmatpush.msra.mxu0 0.0
    %2043 = vmatpush.msra.mxu0 0.0
    %2044 = vmatpush.msra.mxu0 0.0
    %2045 = vmatpush.msra.mxu0 0.0
    %2046 = vmatpush.msra.mxu0 0.0
    %2047 = vmatpush.msra.mxu0 0.0
    %2048 = vmatpush.msra.mxu0 0.0
    %2049 = vmatpush.msra.mxu0 0.0
    %v2050 = vand.u32 %v1764, 4294901760
    %2051 = vmatpush.msra.mxu0 %v2050
    %v2052 = vand.u32 %v1609, 4294901760
    %2053 = vmatpush.msra.mxu0 %v2052
    %v2054 = vand.u32 %v1454, 4294901760
    %2055 = vmatpush.msra.mxu0 %v2054
    %v2056 = vand.u32 %v1299, 4294901760
    %2057 = vmatpush.msra.mxu0 %v2056
    %v2058 = vand.u32 %v1789, 4294901760
    %2059 = vmatmul.f32.gmra.mxu0 %v2058
    %v2060 = vpop.f32.mrf.mxu0
    %v2061 = vadd.f32 %v2024, %v2060
    %v2062 = vand.u32 %v1791, 4294901760
    %2063 = vmatmul.f32.gmra.mxu0 %v2062
    %v2064 = vpop.f32.mrf.mxu0
    %v2065 = vadd.f32 %v2028, %v2064
    %v2066 = vand.u32 %v1793, 4294901760
    %2067 = vmatmul.f32.gmra.mxu0 %v2066
    %v2068 = vpop.f32.mrf.mxu0
    %v2069 = vadd.f32 %v2032, %v2068
    %v2070 = vand.u32 %v1795, 4294901760
    %2071 = vmatmul.f32.gmra.mxu0 %v2070
    %v2072 = vpop.f32.mrf.mxu0
    %v2073 = vadd.f32 %v2036, %v2072
    %2074 = vdwg.mxu0
    %v2075 = vand.u32 2147483647, %v2061
    %vm2076 = vcmp.le.f32.partialorder %v2075, 0.7853982
    %vm2077 = vcmp.lt.s32.totalorder %v2061, 0
    %v2078 = vand.u32 %v2061, 2139095040
    %v2079 = vshrl.u32 %v2078, 23
    %v2080 = vsub.s32 %v2079, 127
    %v2081 = vand.u32 2147483647, %v2061
    %v2082 = vand.u32 %v2081, 8388607
    %v2083 = vor.u32 %v2082, 8388608
    %v2084 = vsub.s32 0, %v2083
    %v2085 = vadd.s32 %v2080, 1
    %vm2086 = vcmp.gt.s32.totalorder %v2085, 0
    %v2087 = vsel %vm2086, %v2085, 0
    %v2088 = vshrl.u32 %v2087, 5
    %v2089 = vand.u32 %v2087, 31
    %v2090 = vsub.s32 32, %v2089
    %v2091 = vshrl.u32 683565275, %v2090
    %v2092 = vshll.u32 683565275, %v2089
    %v2093 = vshrl.u32 2475754826, %v2090
    %v2094 = vor.u32 %v2092, %v2093
    %v2095 = vshll.u32 2475754826, %v2089
    %v2096 = vshrl.u32 2131351028, %v2090
    %v2097 = vor.u32 %v2095, %v2096
    %v2098 = vshll.u32 2131351028, %v2089
    %v2099 = vshrl.u32 2102212464, %v2090
    %v2100 = vor.u32 %v2098, %v2099
    %v2101 = vshll.u32 2102212464, %v2089
    %v2102 = vshrl.u32 920167782, %v2090
    %v2103 = vor.u32 %v2101, %v2102
    %v2104 = vshll.u32 920167782, %v2089
    %v2105 = vshrl.u32 1326507024, %v2090
    %v2106 = vor.u32 %v2104, %v2105
    %vm2107 = vcmp.lt.s32.totalorder %v2088, 1
    %vm2108 = vcmp.lt.s32.totalorder %v2088, 2
    %vm2109 = vcmp.lt.s32.totalorder %v2088, 3
    %vm2110 = vcmp.lt.s32.totalorder %v2088, 4
    %v2111 = vsel %vm2107, %v2091, %v2094
    %v2112 = vsel %vm2110, %v2100, 2102212464
    %v2113 = vsel %vm2109, %v2097, %v2112
    %v2114 = vsel %vm2108, %v2111, %v2113
    %v2115 = vsel %vm2107, %v2094, %v2097
    %v2116 = vsel %vm2110, %v2103, 920167782
    %v2117 = vsel %vm2109, %v2100, %v2116
    %v2118 = vsel %vm2108, %v2115, %v2117
    %v2119 = vsel %vm2107, %v2097, %v2100
    %v2120 = vsel %vm2110, %v2106, 1326507024
    %v2121 = vsel %vm2109, %v2103, %v2120
    %v2122 = vsel %vm2108, %v2119, %v2121
    %v2123 = vshll.u32 %v2083, 8
    %v2124 = vand.u32 %v2123, 65535
    %v2125 = vshrl.u32 %v2123, 16
    %v2126 = vand.u32 %v2122, 65535
    %v2127 = vshrl.u32 %v2122, 16
    %v2128 = vmul.u32 %v2124, %v2126
    %v2129 = vmul.u32 %v2124, %v2127
    %v2130 = vmul.u32 %v2125, %v2126
    %v2131 = vmul.u32 %v2125, %v2127
    %v2132 = vshll.u32 %v2129, 16
    %v2133 = vshrl.u32 %v2129, 16
    %v2134 = vshll.u32 %v2130, 16
    %v2135 = vshrl.u32 %v2130, 16
    %vm2136 = vc.u32 %v2128, %v2132
    %v2137 = vsel %vm2136, 1, 0
    %v2138 = vadd.s32 %v2128, %v2132
    %v2139 = vadd.s32 %v2131, %v2137
    %vm2140 = vc.u32 %v2138, %v2134
    %v2141 = vsel %vm2140, 1, 0
    %v2142 = vadd.s32 %v2138, %v2134
    %v2143 = vadd.s32 %v2139, %v2141
    %v2144 = vadd.s32 %v2143, %v2133
    %v2145 = vadd.s32 %v2144, %v2135
    %v2146 = vand.u32 %v2123, 65535
    %v2147 = vshrl.u32 %v2123, 16
    %v2148 = vand.u32 %v2118, 65535
    %v2149 = vshrl.u32 %v2118, 16
    %v2150 = vmul.u32 %v2146, %v2148
    %v2151 = vmul.u32 %v2146, %v2149
    %v2152 = vmul.u32 %v2147, %v2148
    %v2153 = vmul.u32 %v2147, %v2149
    %v2154 = vshll.u32 %v2151, 16
    %v2155 = vshrl.u32 %v2151, 16
    %v2156 = vshll.u32 %v2152, 16
    %v2157 = vshrl.u32 %v2152, 16
    %vm2158 = vc.u32 %v2150, %v2154
    %v2159 = vsel %vm2158, 1, 0
    %v2160 = vadd.s32 %v2150, %v2154
    %v2161 = vadd.s32 %v2153, %v2159
    %vm2162 = vc.u32 %v2160, %v2156
    %v2163 = vsel %vm2162, 1, 0
    %v2164 = vadd.s32 %v2160, %v2156
    %v2165 = vadd.s32 %v2161, %v2163
    %v2166 = vadd.s32 %v2165, %v2155
    %v2167 = vadd.s32 %v2166, %v2157
    %v2168 = vmul.u32 %v2123, %v2114
    %v2169 = vadd.s32 %v2145, %v2164
    %vm2170 = vc.u32 %v2145, %v2164
    %v2171 = vadd.s32 %v2167, 1
    %v2172 = vsel %vm2170, %v2171, %v2167
    %v2173 = vadd.s32 %v2168, %v2172
    %v2174 = vadd.s32 %v2173, 536870912
    %v2175 = vshrl.u32 %v2174, 30
    %v2176 = vshll.u32 %v2175, 30
    %v2177 = vsub.s32 %v2173, %v2176
    %vm2178 = vcmp.lt.s32.totalorder %v2177, 0
    %v2179 = vsub.s32 0, %v2177
    %v2180 = vsel %vm2178, %v2179, %v2177
    %v2181 = vclz %v2180
    %v2182 = vsub.s32 %v2181, 2
    %vm2183 = vcmp.gt.s32.totalorder 0, %v2182
    %v2184 = vsel %vm2183, 0, %v2182
    %v2185 = vsub.s32 32, %v2184
    %v2186 = vshll.u32 %v2177, %v2184
    %v2187 = vshrl.u32 %v2169, %v2185
    %v2188 = vor.u32 %v2186, %v2187
    %v2189 = vsub.s32 4294967266, %v2184
    %v2190 = vadd.s32 %v2189, 127
    %v2191 = vshll.u32 %v2190, 23
    %v2192 = vor.u32 4788187, %v2191
    %v2193 = vand.u32 2147483647, %v2192
    %v2195 = vcvt.s32.f32 %v2188
    %v2196 = vmul.f32 %v2195, %v2193
    %v2197 = vxor.u32 %v2196, 2147483648
    %v2198 = vsel %vm2077, %v2197, %v2196
    %v2199 = vsub.s32 4, %v2175
    %v2200 = vsel %vm2077, %v2199, %v2175
    %v2201 = vsel %vm2076, %v2061, %v2198
    %v2202 = vsel %vm2076, 0, %v2200
    %v2203 = vmul.f32 %v2201, %v2201
    %v2204 = vmul.f32 %v2203, -0.001358992
    %v2205 = vadd.f32 %v2204, 0.041655596
    %v2206 = vmul.f32 %v2203, %v2205
    %v2207 = vadd.f32 %v2206, -0.4999988
    %v2208 = vmul.f32 %v2203, %v2207
    %v2209 = vadd.f32 1.0, %v2208
    %v2210 = vmul.f32 %v2201, %v2201
    %v2211 = vmul.f32 %v2210, -0.00019511016
    %v2212 = vadd.f32 %v2211, 0.008332121
    %v2213 = vmul.f32 %v2210, %v2212
    %v2214 = vadd.f32 %v2213, -0.16666654
    %v2215 = vmul.f32 %v2210, %v2214
    %v2216 = vadd.f32 %v2215, 1.0
    %v2217 = vmul.f32 %v2216, %v2201
    %vm2218 = vweird.f32 %v2061
    %v2219 = vadd.s32 %v2202, 3
    %v2220 = vand.u32 %v2219, 3
    %vm2221 = vcmp.lt.s32.totalorder %v2220, 2
    %vm2222 = vcmp.eq.s32.totalorder %v2220, 0
    %v2223 = vxor.u32 %v2217, 2147483648
    %v2224 = vsel %vm2222, %v2209, %v2223
    %vm2225 = vcmp.eq.s32.totalorder %v2220, 2
    %v2226 = vxor.u32 %v2209, 2147483648
    %v2227 = vsel %vm2225, %v2226, %v2217
    %v2228 = vsel %vm2221, %v2224, %v2227
    %v2229 = vsel %vm2218, nan, %v2228
    %v2230 = vand.u32 2147483647, %v2065
    %vm2231 = vcmp.le.f32.partialorder %v2230, 0.7853982
    %vm2232 = vcmp.lt.s32.totalorder %v2065, 0
    %v2233 = vand.u32 %v2065, 2139095040
    %v2234 = vshrl.u32 %v2233, 23
    %v2235 = vsub.s32 %v2234, 127
    %v2236 = vand.u32 2147483647, %v2065
    %v2237 = vand.u32 %v2236, 8388607
    %v2238 = vor.u32 %v2237, 8388608
    %v2239 = vsub.s32 0, %v2238
    %v2240 = vadd.s32 %v2235, 1
    %vm2241 = vcmp.gt.s32.totalorder %v2240, 0
    %v2242 = vsel %vm2241, %v2240, 0
    %v2243 = vshrl.u32 %v2242, 5
    %v2244 = vand.u32 %v2242, 31
    %v2245 = vsub.s32 32, %v2244
    %v2246 = vshrl.u32 683565275, %v2245
    %v2247 = vshll.u32 683565275, %v2244
    %v2248 = vshrl.u32 2475754826, %v2245
    %v2249 = vor.u32 %v2247, %v2248
    %v2250 = vshll.u32 2475754826, %v2244
    %v2251 = vshrl.u32 2131351028, %v2245
    %v2252 = vor.u32 %v2250, %v2251
    %v2253 = vshll.u32 2131351028, %v2244
    %v2254 = vshrl.u32 2102212464, %v2245
    %v2255 = vor.u32 %v2253, %v2254
    %v2256 = vshll.u32 2102212464, %v2244
    %v2257 = vshrl.u32 920167782, %v2245
    %v2258 = vor.u32 %v2256, %v2257
    %v2259 = vshll.u32 920167782, %v2244
    %v2260 = vshrl.u32 1326507024, %v2245
    %v2261 = vor.u32 %v2259, %v2260
    %vm2262 = vcmp.lt.s32.totalorder %v2243, 1
    %vm2263 = vcmp.lt.s32.totalorder %v2243, 2
    %vm2264 = vcmp.lt.s32.totalorder %v2243, 3
    %vm2265 = vcmp.lt.s32.totalorder %v2243, 4
    %v2266 = vsel %vm2262, %v2246, %v2249
    %v2267 = vsel %vm2265, %v2255, 2102212464
    %v2268 = vsel %vm2264, %v2252, %v2267
    %v2269 = vsel %vm2263, %v2266, %v2268
    %v2270 = vsel %vm2262, %v2249, %v2252
    %v2271 = vsel %vm2265, %v2258, 920167782
    %v2272 = vsel %vm2264, %v2255, %v2271
    %v2273 = vsel %vm2263, %v2270, %v2272
    %v2274 = vsel %vm2262, %v2252, %v2255
    %v2275 = vsel %vm2265, %v2261, 1326507024
    %v2276 = vsel %vm2264, %v2258, %v2275
    %v2277 = vsel %vm2263, %v2274, %v2276
    %v2278 = vshll.u32 %v2238, 8
    %v2279 = vand.u32 %v2278, 65535
    %v2280 = vshrl.u32 %v2278, 16
    %v2281 = vand.u32 %v2277, 65535
    %v2282 = vshrl.u32 %v2277, 16
    %v2283 = vmul.u32 %v2279, %v2281
    %v2284 = vmul.u32 %v2279, %v2282
    %v2285 = vmul.u32 %v2280, %v2281
    %v2286 = vmul.u32 %v2280, %v2282
    %v2287 = vshll.u32 %v2284, 16
    %v2288 = vshrl.u32 %v2284, 16
    %v2289 = vshll.u32 %v2285, 16
    %v2290 = vshrl.u32 %v2285, 16
    %vm2291 = vc.u32 %v2283, %v2287
    %v2292 = vsel %vm2291, 1, 0
    %v2293 = vadd.s32 %v2283, %v2287
    %v2294 = vadd.s32 %v2286, %v2292
    %vm2295 = vc.u32 %v2293, %v2289
    %v2296 = vsel %vm2295, 1, 0
    %v2297 = vadd.s32 %v2293, %v2289
    %v2298 = vadd.s32 %v2294, %v2296
    %v2299 = vadd.s32 %v2298, %v2288
    %v2300 = vadd.s32 %v2299, %v2290
    %v2301 = vand.u32 %v2278, 65535
    %v2302 = vshrl.u32 %v2278, 16
    %v2303 = vand.u32 %v2273, 65535
    %v2304 = vshrl.u32 %v2273, 16
    %v2305 = vmul.u32 %v2301, %v2303
    %v2306 = vmul.u32 %v2301, %v2304
    %v2307 = vmul.u32 %v2302, %v2303
    %v2308 = vmul.u32 %v2302, %v2304
    %v2309 = vshll.u32 %v2306, 16
    %v2310 = vshrl.u32 %v2306, 16
    %v2311 = vshll.u32 %v2307, 16
    %v2312 = vshrl.u32 %v2307, 16
    %vm2313 = vc.u32 %v2305, %v2309
    %v2314 = vsel %vm2313, 1, 0
    %v2315 = vadd.s32 %v2305, %v2309
    %v2316 = vadd.s32 %v2308, %v2314
    %vm2317 = vc.u32 %v2315, %v2311
    %v2318 = vsel %vm2317, 1, 0
    %v2319 = vadd.s32 %v2315, %v2311
    %v2320 = vadd.s32 %v2316, %v2318
    %v2321 = vadd.s32 %v2320, %v2310
    %v2322 = vadd.s32 %v2321, %v2312
    %v2323 = vmul.u32 %v2278, %v2269
    %v2324 = vadd.s32 %v2300, %v2319
    %vm2325 = vc.u32 %v2300, %v2319
    %v2326 = vadd.s32 %v2322, 1
    %v2327 = vsel %vm2325, %v2326, %v2322
    %v2328 = vadd.s32 %v2323, %v2327
    %v2329 = vadd.s32 %v2328, 536870912
    %v2330 = vshrl.u32 %v2329, 30
    %v2331 = vshll.u32 %v2330, 30
    %v2332 = vsub.s32 %v2328, %v2331
    %vm2333 = vcmp.lt.s32.totalorder %v2332, 0
    %v2334 = vsub.s32 0, %v2332
    %v2335 = vsel %vm2333, %v2334, %v2332
    %v2336 = vclz %v2335
    %v2337 = vsub.s32 %v2336, 2
    %vm2338 = vcmp.gt.s32.totalorder 0, %v2337
    %v2339 = vsel %vm2338, 0, %v2337
    %v2340 = vsub.s32 32, %v2339
    %v2341 = vshll.u32 %v2332, %v2339
    %v2342 = vshrl.u32 %v2324, %v2340
    %v2343 = vor.u32 %v2341, %v2342
    %v2344 = vsub.s32 4294967266, %v2339
    %v2345 = vadd.s32 %v2344, 127
    %v2346 = vshll.u32 %v2345, 23
    %v2347 = vor.u32 4788187, %v2346
    %v2348 = vand.u32 2147483647, %v2347
    %v2350 = vcvt.s32.f32 %v2343
    %v2351 = vmul.f32 %v2350, %v2348
    %v2352 = vxor.u32 %v2351, 2147483648
    %v2353 = vsel %vm2232, %v2352, %v2351
    %v2354 = vsub.s32 4, %v2330
    %v2355 = vsel %vm2232, %v2354, %v2330
    %v2356 = vsel %vm2231, %v2065, %v2353
    %v2357 = vsel %vm2231, 0, %v2355
    %v2358 = vmul.f32 %v2356, %v2356
    %v2359 = vmul.f32 %v2358, -0.001358992
    %v2360 = vadd.f32 %v2359, 0.041655596
    %v2361 = vmul.f32 %v2358, %v2360
    %v2362 = vadd.f32 %v2361, -0.4999988
    %v2363 = vmul.f32 %v2358, %v2362
    %v2364 = vadd.f32 1.0, %v2363
    %v2365 = vmul.f32 %v2356, %v2356
    %v2366 = vmul.f32 %v2365, -0.00019511016
    %v2367 = vadd.f32 %v2366, 0.008332121
    %v2368 = vmul.f32 %v2365, %v2367
    %v2369 = vadd.f32 %v2368, -0.16666654
    %v2370 = vmul.f32 %v2365, %v2369
    %v2371 = vadd.f32 %v2370, 1.0
    %v2372 = vmul.f32 %v2371, %v2356
    %vm2373 = vweird.f32 %v2065
    %v2374 = vadd.s32 %v2357, 3
    %v2375 = vand.u32 %v2374, 3
    %vm2376 = vcmp.lt.s32.totalorder %v2375, 2
    %vm2377 = vcmp.eq.s32.totalorder %v2375, 0
    %v2378 = vxor.u32 %v2372, 2147483648
    %v2379 = vsel %vm2377, %v2364, %v2378
    %vm2380 = vcmp.eq.s32.totalorder %v2375, 2
    %v2381 = vxor.u32 %v2364, 2147483648
    %v2382 = vsel %vm2380, %v2381, %v2372
    %v2383 = vsel %vm2376, %v2379, %v2382
    %v2384 = vsel %vm2373, nan, %v2383
    %v2385 = vand.u32 2147483647, %v2069
    %vm2386 = vcmp.le.f32.partialorder %v2385, 0.7853982
    %vm2387 = vcmp.lt.s32.totalorder %v2069, 0
    %v2388 = vand.u32 %v2069, 2139095040
    %v2389 = vshrl.u32 %v2388, 23
    %v2390 = vsub.s32 %v2389, 127
    %v2391 = vand.u32 2147483647, %v2069
    %v2392 = vand.u32 %v2391, 8388607
    %v2393 = vor.u32 %v2392, 8388608
    %v2394 = vsub.s32 0, %v2393
    %v2395 = vadd.s32 %v2390, 1
    %vm2396 = vcmp.gt.s32.totalorder %v2395, 0
    %v2397 = vsel %vm2396, %v2395, 0
    %v2398 = vshrl.u32 %v2397, 5
    %v2399 = vand.u32 %v2397, 31
    %v2400 = vsub.s32 32, %v2399
    %v2401 = vshrl.u32 683565275, %v2400
    %v2402 = vshll.u32 683565275, %v2399
    %v2403 = vshrl.u32 2475754826, %v2400
    %v2404 = vor.u32 %v2402, %v2403
    %v2405 = vshll.u32 2475754826, %v2399
    %v2406 = vshrl.u32 2131351028, %v2400
    %v2407 = vor.u32 %v2405, %v2406
    %v2408 = vshll.u32 2131351028, %v2399
    %v2409 = vshrl.u32 2102212464, %v2400
    %v2410 = vor.u32 %v2408, %v2409
    %v2411 = vshll.u32 2102212464, %v2399
    %v2412 = vshrl.u32 920167782, %v2400
    %v2413 = vor.u32 %v2411, %v2412
    %v2414 = vshll.u32 920167782, %v2399
    %v2415 = vshrl.u32 1326507024, %v2400
    %v2416 = vor.u32 %v2414, %v2415
    %vm2417 = vcmp.lt.s32.totalorder %v2398, 1
    %vm2418 = vcmp.lt.s32.totalorder %v2398, 2
    %vm2419 = vcmp.lt.s32.totalorder %v2398, 3
    %vm2420 = vcmp.lt.s32.totalorder %v2398, 4
    %v2421 = vsel %vm2417, %v2401, %v2404
    %v2422 = vsel %vm2420, %v2410, 2102212464
    %v2423 = vsel %vm2419, %v2407, %v2422
    %v2424 = vsel %vm2418, %v2421, %v2423
    %v2425 = vsel %vm2417, %v2404, %v2407
    %v2426 = vsel %vm2420, %v2413, 920167782
    %v2427 = vsel %vm2419, %v2410, %v2426
    %v2428 = vsel %vm2418, %v2425, %v2427
    %v2429 = vsel %vm2417, %v2407, %v2410
    %v2430 = vsel %vm2420, %v2416, 1326507024
    %v2431 = vsel %vm2419, %v2413, %v2430
    %v2432 = vsel %vm2418, %v2429, %v2431
    %v2433 = vshll.u32 %v2393, 8
    %v2434 = vand.u32 %v2433, 65535
    %v2435 = vshrl.u32 %v2433, 16
    %v2436 = vand.u32 %v2432, 65535
    %v2437 = vshrl.u32 %v2432, 16
    %v2438 = vmul.u32 %v2434, %v2436
    %v2439 = vmul.u32 %v2434, %v2437
    %v2440 = vmul.u32 %v2435, %v2436
    %v2441 = vmul.u32 %v2435, %v2437
    %v2442 = vshll.u32 %v2439, 16
    %v2443 = vshrl.u32 %v2439, 16
    %v2444 = vshll.u32 %v2440, 16
    %v2445 = vshrl.u32 %v2440, 16
    %vm2446 = vc.u32 %v2438, %v2442
    %v2447 = vsel %vm2446, 1, 0
    %v2448 = vadd.s32 %v2438, %v2442
    %v2449 = vadd.s32 %v2441, %v2447
    %vm2450 = vc.u32 %v2448, %v2444
    %v2451 = vsel %vm2450, 1, 0
    %v2452 = vadd.s32 %v2448, %v2444
    %v2453 = vadd.s32 %v2449, %v2451
    %v2454 = vadd.s32 %v2453, %v2443
    %v2455 = vadd.s32 %v2454, %v2445
    %v2456 = vand.u32 %v2433, 65535
    %v2457 = vshrl.u32 %v2433, 16
    %v2458 = vand.u32 %v2428, 65535
    %v2459 = vshrl.u32 %v2428, 16
    %v2460 = vmul.u32 %v2456, %v2458
    %v2461 = vmul.u32 %v2456, %v2459
    %v2462 = vmul.u32 %v2457, %v2458
    %v2463 = vmul.u32 %v2457, %v2459
    %v2464 = vshll.u32 %v2461, 16
    %v2465 = vshrl.u32 %v2461, 16
    %v2466 = vshll.u32 %v2462, 16
    %v2467 = vshrl.u32 %v2462, 16
    %vm2468 = vc.u32 %v2460, %v2464
    %v2469 = vsel %vm2468, 1, 0
    %v2470 = vadd.s32 %v2460, %v2464
    %v2471 = vadd.s32 %v2463, %v2469
    %vm2472 = vc.u32 %v2470, %v2466
    %v2473 = vsel %vm2472, 1, 0
    %v2474 = vadd.s32 %v2470, %v2466
    %v2475 = vadd.s32 %v2471, %v2473
    %v2476 = vadd.s32 %v2475, %v2465
    %v2477 = vadd.s32 %v2476, %v2467
    %v2478 = vmul.u32 %v2433, %v2424
    %v2479 = vadd.s32 %v2455, %v2474
    %vm2480 = vc.u32 %v2455, %v2474
    %v2481 = vadd.s32 %v2477, 1
    %v2482 = vsel %vm2480, %v2481, %v2477
    %v2483 = vadd.s32 %v2478, %v2482
    %v2484 = vadd.s32 %v2483, 536870912
    %v2485 = vshrl.u32 %v2484, 30
    %v2486 = vshll.u32 %v2485, 30
    %v2487 = vsub.s32 %v2483, %v2486
    %vm2488 = vcmp.lt.s32.totalorder %v2487, 0
    %v2489 = vsub.s32 0, %v2487
    %v2490 = vsel %vm2488, %v2489, %v2487
    %v2491 = vclz %v2490
    %v2492 = vsub.s32 %v2491, 2
    %vm2493 = vcmp.gt.s32.totalorder 0, %v2492
    %v2494 = vsel %vm2493, 0, %v2492
    %v2495 = vsub.s32 32, %v2494
    %v2496 = vshll.u32 %v2487, %v2494
    %v2497 = vshrl.u32 %v2479, %v2495
    %v2498 = vor.u32 %v2496, %v2497
    %v2499 = vsub.s32 4294967266, %v2494
    %v2500 = vadd.s32 %v2499, 127
    %v2501 = vshll.u32 %v2500, 23
    %v2502 = vor.u32 4788187, %v2501
    %v2503 = vand.u32 2147483647, %v2502
    %v2505 = vcvt.s32.f32 %v2498
    %v2506 = vmul.f32 %v2505, %v2503
    %v2507 = vxor.u32 %v2506, 2147483648
    %v2508 = vsel %vm2387, %v2507, %v2506
    %v2509 = vsub.s32 4, %v2485
    %v2510 = vsel %vm2387, %v2509, %v2485
    %v2511 = vsel %vm2386, %v2069, %v2508
    %v2512 = vsel %vm2386, 0, %v2510
    %v2513 = vmul.f32 %v2511, %v2511
    %v2514 = vmul.f32 %v2513, -0.001358992
    %v2515 = vadd.f32 %v2514, 0.041655596
    %v2516 = vmul.f32 %v2513, %v2515
    %v2517 = vadd.f32 %v2516, -0.4999988
    %v2518 = vmul.f32 %v2513, %v2517
    %v2519 = vadd.f32 1.0, %v2518
    %v2520 = vmul.f32 %v2511, %v2511
    %v2521 = vmul.f32 %v2520, -0.00019511016
    %v2522 = vadd.f32 %v2521, 0.008332121
    %v2523 = vmul.f32 %v2520, %v2522
    %v2524 = vadd.f32 %v2523, -0.16666654
    %v2525 = vmul.f32 %v2520, %v2524
    %v2526 = vadd.f32 %v2525, 1.0
    %v2527 = vmul.f32 %v2526, %v2511
    %vm2528 = vweird.f32 %v2069
    %v2529 = vadd.s32 %v2512, 3
    %v2530 = vand.u32 %v2529, 3
    %vm2531 = vcmp.lt.s32.totalorder %v2530, 2
    %vm2532 = vcmp.eq.s32.totalorder %v2530, 0
    %v2533 = vxor.u32 %v2527, 2147483648
    %v2534 = vsel %vm2532, %v2519, %v2533
    %vm2535 = vcmp.eq.s32.totalorder %v2530, 2
    %v2536 = vxor.u32 %v2519, 2147483648
    %v2537 = vsel %vm2535, %v2536, %v2527
    %v2538 = vsel %vm2531, %v2534, %v2537
    %v2539 = vsel %vm2528, nan, %v2538
    %v2540 = vand.u32 2147483647, %v2073
    %vm2541 = vcmp.le.f32.partialorder %v2540, 0.7853982
    %vm2542 = vcmp.lt.s32.totalorder %v2073, 0
    %v2543 = vand.u32 %v2073, 2139095040
    %v2544 = vshrl.u32 %v2543, 23
    %v2545 = vsub.s32 %v2544, 127
    %v2546 = vand.u32 2147483647, %v2073
    %v2547 = vand.u32 %v2546, 8388607
    %v2548 = vor.u32 %v2547, 8388608
    %v2549 = vsub.s32 0, %v2548
    %v2550 = vadd.s32 %v2545, 1
    %vm2551 = vcmp.gt.s32.totalorder %v2550, 0
    %v2552 = vsel %vm2551, %v2550, 0
    %v2553 = vshrl.u32 %v2552, 5
    %v2554 = vand.u32 %v2552, 31
    %v2555 = vsub.s32 32, %v2554
    %v2556 = vshrl.u32 683565275, %v2555
    %v2557 = vshll.u32 683565275, %v2554
    %v2558 = vshrl.u32 2475754826, %v2555
    %v2559 = vor.u32 %v2557, %v2558
    %v2560 = vshll.u32 2475754826, %v2554
    %v2561 = vshrl.u32 2131351028, %v2555
    %v2562 = vor.u32 %v2560, %v2561
    %v2563 = vshll.u32 2131351028, %v2554
    %v2564 = vshrl.u32 2102212464, %v2555
    %v2565 = vor.u32 %v2563, %v2564
    %v2566 = vshll.u32 2102212464, %v2554
    %v2567 = vshrl.u32 920167782, %v2555
    %v2568 = vor.u32 %v2566, %v2567
    %v2569 = vshll.u32 920167782, %v2554
    %v2570 = vshrl.u32 1326507024, %v2555
    %v2571 = vor.u32 %v2569, %v2570
    %vm2572 = vcmp.lt.s32.totalorder %v2553, 1
    %vm2573 = vcmp.lt.s32.totalorder %v2553, 2
    %vm2574 = vcmp.lt.s32.totalorder %v2553, 3
    %vm2575 = vcmp.lt.s32.totalorder %v2553, 4
    %v2576 = vsel %vm2572, %v2556, %v2559
    %v2577 = vsel %vm2575, %v2565, 2102212464
    %v2578 = vsel %vm2574, %v2562, %v2577
    %v2579 = vsel %vm2573, %v2576, %v2578
    %v2580 = vsel %vm2572, %v2559, %v2562
    %v2581 = vsel %vm2575, %v2568, 920167782
    %v2582 = vsel %vm2574, %v2565, %v2581
    %v2583 = vsel %vm2573, %v2580, %v2582
    %v2584 = vsel %vm2572, %v2562, %v2565
    %v2585 = vsel %vm2575, %v2571, 1326507024
    %v2586 = vsel %vm2574, %v2568, %v2585
    %v2587 = vsel %vm2573, %v2584, %v2586
    %v2588 = vshll.u32 %v2548, 8
    %v2589 = vand.u32 %v2588, 65535
    %v2590 = vshrl.u32 %v2588, 16
    %v2591 = vand.u32 %v2587, 65535
    %v2592 = vshrl.u32 %v2587, 16
    %v2593 = vmul.u32 %v2589, %v2591
    %v2594 = vmul.u32 %v2589, %v2592
    %v2595 = vmul.u32 %v2590, %v2591
    %v2596 = vmul.u32 %v2590, %v2592
    %v2597 = vshll.u32 %v2594, 16
    %v2598 = vshrl.u32 %v2594, 16
    %v2599 = vshll.u32 %v2595, 16
    %v2600 = vshrl.u32 %v2595, 16
    %vm2601 = vc.u32 %v2593, %v2597
    %v2602 = vsel %vm2601, 1, 0
    %v2603 = vadd.s32 %v2593, %v2597
    %v2604 = vadd.s32 %v2596, %v2602
    %vm2605 = vc.u32 %v2603, %v2599
    %v2606 = vsel %vm2605, 1, 0
    %v2607 = vadd.s32 %v2603, %v2599
    %v2608 = vadd.s32 %v2604, %v2606
    %v2609 = vadd.s32 %v2608, %v2598
    %v2610 = vadd.s32 %v2609, %v2600
    %v2611 = vand.u32 %v2588, 65535
    %v2612 = vshrl.u32 %v2588, 16
    %v2613 = vand.u32 %v2583, 65535
    %v2614 = vshrl.u32 %v2583, 16
    %v2615 = vmul.u32 %v2611, %v2613
    %v2616 = vmul.u32 %v2611, %v2614
    %v2617 = vmul.u32 %v2612, %v2613
    %v2618 = vmul.u32 %v2612, %v2614
    %v2619 = vshll.u32 %v2616, 16
    %v2620 = vshrl.u32 %v2616, 16
    %v2621 = vshll.u32 %v2617, 16
    %v2622 = vshrl.u32 %v2617, 16
    %vm2623 = vc.u32 %v2615, %v2619
    %v2624 = vsel %vm2623, 1, 0
    %v2625 = vadd.s32 %v2615, %v2619
    %v2626 = vadd.s32 %v2618, %v2624
    %vm2627 = vc.u32 %v2625, %v2621
    %v2628 = vsel %vm2627, 1, 0
    %v2629 = vadd.s32 %v2625, %v2621
    %v2630 = vadd.s32 %v2626, %v2628
    %v2631 = vadd.s32 %v2630, %v2620
    %v2632 = vadd.s32 %v2631, %v2622
    %v2633 = vmul.u32 %v2588, %v2579
    %v2634 = vadd.s32 %v2610, %v2629
    %vm2635 = vc.u32 %v2610, %v2629
    %v2636 = vadd.s32 %v2632, 1
    %v2637 = vsel %vm2635, %v2636, %v2632
    %v2638 = vadd.s32 %v2633, %v2637
    %v2639 = vadd.s32 %v2638, 536870912
    %v2640 = vshrl.u32 %v2639, 30
    %v2641 = vshll.u32 %v2640, 30
    %v2642 = vsub.s32 %v2638, %v2641
    %vm2643 = vcmp.lt.s32.totalorder %v2642, 0
    %v2644 = vsub.s32 0, %v2642
    %v2645 = vsel %vm2643, %v2644, %v2642
    %v2646 = vclz %v2645
    %v2647 = vsub.s32 %v2646, 2
    %vm2648 = vcmp.gt.s32.totalorder 0, %v2647
    %v2649 = vsel %vm2648, 0, %v2647
    %v2650 = vsub.s32 32, %v2649
    %v2651 = vshll.u32 %v2642, %v2649
    %v2652 = vshrl.u32 %v2634, %v2650
    %v2653 = vor.u32 %v2651, %v2652
    %v2654 = vsub.s32 4294967266, %v2649
    %v2655 = vadd.s32 %v2654, 127
    %v2656 = vshll.u32 %v2655, 23
    %v2657 = vor.u32 4788187, %v2656
    %v2658 = vand.u32 2147483647, %v2657
    %v2660 = vcvt.s32.f32 %v2653
    %v2661 = vmul.f32 %v2660, %v2658
    %v2662 = vxor.u32 %v2661, 2147483648
    %v2663 = vsel %vm2542, %v2662, %v2661
    %v2664 = vsub.s32 4, %v2640
    %v2665 = vsel %vm2542, %v2664, %v2640
    %v2666 = vsel %vm2541, %v2073, %v2663
    %v2667 = vsel %vm2541, 0, %v2665
    %v2668 = vmul.f32 %v2666, %v2666
    %v2669 = vmul.f32 %v2668, -0.001358992
    %v2670 = vadd.f32 %v2669, 0.041655596
    %v2671 = vmul.f32 %v2668, %v2670
    %v2672 = vadd.f32 %v2671, -0.4999988
    %v2673 = vmul.f32 %v2668, %v2672
    %v2674 = vadd.f32 1.0, %v2673
    %v2675 = vmul.f32 %v2666, %v2666
    %v2676 = vmul.f32 %v2675, -0.00019511016
    %v2677 = vadd.f32 %v2676, 0.008332121
    %v2678 = vmul.f32 %v2675, %v2677
    %v2679 = vadd.f32 %v2678, -0.16666654
    %v2680 = vmul.f32 %v2675, %v2679
    %v2681 = vadd.f32 %v2680, 1.0
    %v2682 = vmul.f32 %v2681, %v2666
    %vm2683 = vweird.f32 %v2073
    %v2684 = vadd.s32 %v2667, 3
    %v2685 = vand.u32 %v2684, 3
    %vm2686 = vcmp.lt.s32.totalorder %v2685, 2
    %vm2687 = vcmp.eq.s32.totalorder %v2685, 0
    %v2688 = vxor.u32 %v2682, 2147483648
    %v2689 = vsel %vm2687, %v2674, %v2688
    %vm2690 = vcmp.eq.s32.totalorder %v2685, 2
    %v2691 = vxor.u32 %v2674, 2147483648
    %v2692 = vsel %vm2690, %v2691, %v2682
    %v2693 = vsel %vm2686, %v2689, %v2692
    %v2694 = vsel %vm2683, nan, %v2693
    %2695 = vset.pattern.permute.xlu0 105
    %2696 = vperm.xlu0 %2695, %v42
    %v2697 = vpop.permute.xlu0 %2696
    %2699 = vrot.lane.b32.xlu0 %v42, 55
    %v2700 = vpop.permute.xlu0 %2699
    %v2701 = vsel %vm838, %v2700, 0
    %2703 = vmatpush.msra.mxu0 0.0
    %2704 = vmatpush.msra.mxu0 0.0
    %2705 = vmatpush.msra.mxu0 0.0
    %2706 = vmatpush.msra.mxu0 0.0
    %2707 = vmatpush.msra.mxu0 0.0
    %2708 = vmatpush.msra.mxu0 0.0
    %2709 = vmatpush.msra.mxu0 0.0
    %2710 = vmatpush.msra.mxu0 0.0
    %2711 = vmatpush.msra.mxu0 0.0
    %2712 = vmatpush.msra.mxu0 0.0
    %2713 = vmatpush.msra.mxu0 0.0
    %2714 = vmatpush.msra.mxu0 0.0
    %v2715 = vand.u32 %v2694, 4294901760
    %2716 = vmatpush.msra.mxu0 %v2715
    %v2717 = vand.u32 %v2539, 4294901760
    %2718 = vmatpush.msra.mxu0 %v2717
    %v2719 = vand.u32 %v2384, 4294901760
    %2720 = vmatpush.msra.mxu0 %v2719
    %v2721 = vand.u32 %v2229, 4294901760
    %2722 = vmatpush.msra.mxu0 %v2721
    %v2723 = vand.u32 %v2701, 4294901760
    %v2724 = vsub.f32 %v2701, %v2723
    %v2725 = vand.u32 %v2724, 4294901760
    %v2726 = vsub.f32 %v2724, %v2725
    %v2727 = vand.u32 %v2726, 4294901760
    %2728 = vmatmul.f32.gmra.mxu0 %v2727
    %v2729 = vpop.f32.mrf.mxu0
    %v2730 = vadd.f32 %v2697, %v2729
    %2731 = vdwg.mxu0
    %2732 = vmatpush.msra.mxu0 0.0
    %2733 = vmatpush.msra.mxu0 0.0
    %2734 = vmatpush.msra.mxu0 0.0
    %2735 = vmatpush.msra.mxu0 0.0
    %2736 = vmatpush.msra.mxu0 0.0
    %2737 = vmatpush.msra.mxu0 0.0
    %2738 = vmatpush.msra.mxu0 0.0
    %2739 = vmatpush.msra.mxu0 0.0
    %2740 = vmatpush.msra.mxu0 0.0
    %2741 = vmatpush.msra.mxu0 0.0
    %2742 = vmatpush.msra.mxu0 0.0
    %2743 = vmatpush.msra.mxu0 0.0
    %v2744 = vand.u32 %v2694, 4294901760
    %v2745 = vsub.f32 %v2694, %v2744
    %v2746 = vand.u32 %v2745, 4294901760
    %v2747 = vsub.f32 %v2745, %v2746
    %v2748 = vand.u32 %v2747, 4294901760
    %2749 = vmatpush.msra.mxu0 %v2748
    %v2750 = vand.u32 %v2539, 4294901760
    %v2751 = vsub.f32 %v2539, %v2750
    %v2752 = vand.u32 %v2751, 4294901760
    %v2753 = vsub.f32 %v2751, %v2752
    %v2754 = vand.u32 %v2753, 4294901760
    %2755 = vmatpush.msra.mxu0 %v2754
    %v2756 = vand.u32 %v2384, 4294901760
    %v2757 = vsub.f32 %v2384, %v2756
    %v2758 = vand.u32 %v2757, 4294901760
    %v2759 = vsub.f32 %v2757, %v2758
    %v2760 = vand.u32 %v2759, 4294901760
    %2761 = vmatpush.msra.mxu0 %v2760
    %v2762 = vand.u32 %v2229, 4294901760
    %v2763 = vsub.f32 %v2229, %v2762
    %v2764 = vand.u32 %v2763, 4294901760
    %v2765 = vsub.f32 %v2763, %v2764
    %v2766 = vand.u32 %v2765, 4294901760
    %2767 = vmatpush.msra.mxu0 %v2766
    %v2768 = vand.u32 %v2701, 4294901760
    %2769 = vmatmul.f32.gmra.mxu0 %v2768
    %v2770 = vpop.f32.mrf.mxu0
    %v2771 = vadd.f32 %v2730, %v2770
    %2772 = vdwg.mxu0
    %2773 = vmatpush.msra.mxu0 0.0
    %2774 = vmatpush.msra.mxu0 0.0
    %2775 = vmatpush.msra.mxu0 0.0
    %2776 = vmatpush.msra.mxu0 0.0
    %2777 = vmatpush.msra.mxu0 0.0
    %2778 = vmatpush.msra.mxu0 0.0
    %2779 = vmatpush.msra.mxu0 0.0
    %2780 = vmatpush.msra.mxu0 0.0
    %2781 = vmatpush.msra.mxu0 0.0
    %2782 = vmatpush.msra.mxu0 0.0
    %2783 = vmatpush.msra.mxu0 0.0
    %2784 = vmatpush.msra.mxu0 0.0
    %v2785 = vand.u32 %v2694, 4294901760
    %v2786 = vsub.f32 %v2694, %v2785
    %2787 = vmatpush.msra.mxu0 %v2786
    %v2788 = vand.u32 %v2539, 4294901760
    %v2789 = vsub.f32 %v2539, %v2788
    %2790 = vmatpush.msra.mxu0 %v2789
    %v2791 = vand.u32 %v2384, 4294901760
    %v2792 = vsub.f32 %v2384, %v2791
    %2793 = vmatpush.msra.mxu0 %v2792
    %v2794 = vand.u32 %v2229, 4294901760
    %v2795 = vsub.f32 %v2229, %v2794
    %2796 = vmatpush.msra.mxu0 %v2795
    %v2797 = vand.u32 %v2701, 4294901760
    %v2798 = vsub.f32 %v2701, %v2797
    %2799 = vmatmul.f32.gmra.mxu0 %v2798
    %v2800 = vpop.f32.mrf.mxu0
    %v2801 = vadd.f32 %v2771, %v2800
    %2802 = vdwg.mxu0
    %2803 = vmatpush.msra.mxu0 0.0
    %2804 = vmatpush.msra.mxu0 0.0
    %2805 = vmatpush.msra.mxu0 0.0
    %2806 = vmatpush.msra.mxu0 0.0
    %2807 = vmatpush.msra.mxu0 0.0
    %2808 = vmatpush.msra.mxu0 0.0
    %2809 = vmatpush.msra.mxu0 0.0
    %2810 = vmatpush.msra.mxu0 0.0
    %2811 = vmatpush.msra.mxu0 0.0
    %2812 = vmatpush.msra.mxu0 0.0
    %2813 = vmatpush.msra.mxu0 0.0
    %2814 = vmatpush.msra.mxu0 0.0
    %v2815 = vand.u32 %v2694, 4294901760
    %2816 = vmatpush.msra.mxu0 %v2815
    %v2817 = vand.u32 %v2539, 4294901760
    %2818 = vmatpush.msra.mxu0 %v2817
    %v2819 = vand.u32 %v2384, 4294901760
    %2820 = vmatpush.msra.mxu0 %v2819
    %v2821 = vand.u32 %v2229, 4294901760
    %2822 = vmatpush.msra.mxu0 %v2821
    %v2823 = vand.u32 %v2701, 4294901760
    %v2824 = vsub.f32 %v2701, %v2823
    %v2825 = vand.u32 %v2824, 4294901760
    %2826 = vmatmul.f32.gmra.mxu0 %v2825
    %v2827 = vpop.f32.mrf.mxu0
    %v2828 = vadd.f32 %v2801, %v2827
    %2829 = vdwg.mxu0
    %2830 = vmatpush.msra.mxu0 0.0
    %2831 = vmatpush.msra.mxu0 0.0
    %2832 = vmatpush.msra.mxu0 0.0
    %2833 = vmatpush.msra.mxu0 0.0
    %2834 = vmatpush.msra.mxu0 0.0
    %2835 = vmatpush.msra.mxu0 0.0
    %2836 = vmatpush.msra.mxu0 0.0
    %2837 = vmatpush.msra.mxu0 0.0
    %2838 = vmatpush.msra.mxu0 0.0
    %2839 = vmatpush.msra.mxu0 0.0
    %2840 = vmatpush.msra.mxu0 0.0
    %2841 = vmatpush.msra.mxu0 0.0
    %v2842 = vand.u32 %v2694, 4294901760
    %v2843 = vsub.f32 %v2694, %v2842
    %v2844 = vand.u32 %v2843, 4294901760
    %2845 = vmatpush.msra.mxu0 %v2844
    %v2846 = vand.u32 %v2539, 4294901760
    %v2847 = vsub.f32 %v2539, %v2846
    %v2848 = vand.u32 %v2847, 4294901760
    %2849 = vmatpush.msra.mxu0 %v2848
    %v2850 = vand.u32 %v2384, 4294901760
    %v2851 = vsub.f32 %v2384, %v2850
    %v2852 = vand.u32 %v2851, 4294901760
    %2853 = vmatpush.msra.mxu0 %v2852
    %v2854 = vand.u32 %v2229, 4294901760
    %v2855 = vsub.f32 %v2229, %v2854
    %v2856 = vand.u32 %v2855, 4294901760
    %2857 = vmatpush.msra.mxu0 %v2856
    %v2858 = vand.u32 %v2701, 4294901760
    %2859 = vmatmul.f32.gmra.mxu0 %v2858
    %v2860 = vpop.f32.mrf.mxu0
    %v2861 = vadd.f32 %v2828, %v2860
    %2862 = vdwg.mxu0
    %2863 = vmatpush.msra.mxu0 0.0
    %2864 = vmatpush.msra.mxu0 0.0
    %2865 = vmatpush.msra.mxu0 0.0
    %2866 = vmatpush.msra.mxu0 0.0
    %2867 = vmatpush.msra.mxu0 0.0
    %2868 = vmatpush.msra.mxu0 0.0
    %2869 = vmatpush.msra.mxu0 0.0
    %2870 = vmatpush.msra.mxu0 0.0
    %2871 = vmatpush.msra.mxu0 0.0
    %2872 = vmatpush.msra.mxu0 0.0
    %2873 = vmatpush.msra.mxu0 0.0
    %2874 = vmatpush.msra.mxu0 0.0
    %v2875 = vand.u32 %v2694, 4294901760
    %2876 = vmatpush.msra.mxu0 %v2875
    %v2877 = vand.u32 %v2539, 4294901760
    %2878 = vmatpush.msra.mxu0 %v2877
    %v2879 = vand.u32 %v2384, 4294901760
    %2880 = vmatpush.msra.mxu0 %v2879
    %v2881 = vand.u32 %v2229, 4294901760
    %2882 = vmatpush.msra.mxu0 %v2881
    %v2883 = vand.u32 %v2701, 4294901760
    %2884 = vmatmul.f32.gmra.mxu0 %v2883
    %v2885 = vpop.f32.mrf.mxu0
    %v2886 = vadd.f32 %v2861, %v2885
    %2887 = vdwg.mxu0
    %2888 = vst [vmem:[#allocation7] sm:$0xf] %v2886
    // Predicated region
    $region18: #{tpu_custom_call.1} parent=1 // pred_check
      _
    $region19: #{tpu_custom_call.1} parent=1 // pred_check_branch
      %2890 = sbr.rel (0) target = $region21
    $region20: #{tpu_custom_call.1} parent=1 // pred_region
      %2892 = vsyncadd [#allocation4], 0
      %s2894 = sshll.u32 [#allocation7], 4
      %s2895 = int_to_ptr.vmem [resolvable:$true] %s2894
      %s2896 = sshll.u32 %s2, 4
      %s2897 = int_to_ptr.hbm [resolvable:$true] %s2896
      %2899 = dma.vmem_to_hbm [thread:$0]  %s2895, 64, %s2897, [#allocation4]
    $region21: #{tpu_custom_call.1} parent=1 // pred_fallthru
      _
    // Predicated region
    $region22: #{tpu_custom_call.1} parent=1 // pred_check
      _
    $region23: #{tpu_custom_call.1} parent=1 // pred_check_branch
      %2901 = sbr.rel (0) target = $region25
    $region24: #{tpu_custom_call.1} parent=1 // pred_region
      %2903 = dma.done [#allocation4], 64
    $region25: #{tpu_custom_call.1} parent=1 // pred_fallthru
      _
    %2904 = vsyncpa [#allocation3], 1
    %2905 = vsyncpa [#allocation6], 1
    %2906 = vsyncpa [#allocation4], 1

</llo_original>
